<compile_context>
chip_gen: v5e
topology: v5e:2x2
jax: 0.10.0
libtpu: 0.0.40
codegen_flags: <defaults>
</compile_context>

<pallas_src>
import functools
import math

import jax
import jax.numpy as jnp
from jax.experimental import pallas as pl
from jax.experimental.pallas import tpu as pltpu


def _round_up(x, m):
    return (x + m - 1) // m * m


def _lstm_chunk_kernel(x_ref, wih_hbm, whh_hbm, b_hbm, out_ref,
                       wih_v, whh_v, b_v, xg_ref, h_ref, c_ref):
    """One grid step == one chunk of Tc LSTM timesteps for one batch block.

    x_ref   : (Tc*Bblk, Ep)   time-major input rows for this chunk (VMEM block)
    wih_hbm : (Ep, 4Hp)       W_ih^T, raw HBM ref (memory_space=pl.ANY)
    whh_hbm : (Hp, 4Hp)       W_hh^T, raw HBM ref
    b_hbm   : (1, 4Hp)        b_ih + b_hh, raw HBM ref
    out_ref : (Tc*Bblk, Hp)   hidden states for this chunk
    wih_v/whh_v/b_v           single-buffered VMEM weight scratch
    xg_ref  : (Tc*Bblk, 4Hp)  VMEM scratch for the chunk input projection
    h_ref/c_ref : (Bblk, Hp)  cross-chunk carries (VMEM scratch)
    """
    Bblk, Hp = h_ref.shape
    steps = x_ref.shape[0] // Bblk          # Tc (trace-time constant)

    @pl.when(pl.program_id(1) == 0)
    def _init():
        # One-time (per batch block) weight load: single-buffered in VMEM.
        pltpu.sync_copy(wih_hbm, wih_v)
        pltpu.sync_copy(whh_hbm, whh_v)
        pltpu.sync_copy(b_hbm, b_v)
        h_ref[...] = jnp.zeros(h_ref.shape, h_ref.dtype)
        c_ref[...] = jnp.zeros(c_ref.shape, c_ref.dtype)

    # Chunk-level input projection: one big MXU matmul for all Tc timesteps,
    # bias fused, result materialized into VMEM scratch (f32 accumulation).
    xg_ref[...] = (jnp.dot(x_ref[...], wih_v[...],
                           preferred_element_type=jnp.float32)
                   + b_v[...])

    whh = whh_v[...]                        # read recurrent weights once
    mm_dtype = whh.dtype                    # f32 or bf16 (MXU operand dtype)

    # Recurrence: h/c live in vregs; only h @ W_hh^T is on the serial critical
    # path per step.  All slices/stores are (8,128)-tile aligned because
    # Bblk % 8 == 0 and Hp % 128 == 0 (each gate owns whole lane tiles).
    h = h_ref[...]
    c = c_ref[...]
    for t in range(steps):
        r0 = t * Bblk                                          # static offset
        gates = xg_ref[r0:r0 + Bblk, :] + jnp.dot(
            h.astype(mm_dtype), whh, preferred_element_type=jnp.float32)
        i_g = jax.nn.sigmoid(gates[:, 0 * Hp:1 * Hp])
        f_g = jax.nn.sigmoid(gates[:, 1 * Hp:2 * Hp])
        g_g = jnp.tanh(gates[:, 2 * Hp:3 * Hp])
        o_g = jax.nn.sigmoid(gates[:, 3 * Hp:4 * Hp])
        c = f_g * c + i_g * g_g
        h = o_g * jnp.tanh(c)
        out_ref[r0:r0 + Bblk, :] = h.astype(out_ref.dtype)

    # Cross-chunk carry: exactly one VMEM store per chunk (not per step).
    h_ref[...] = h
    c_ref[...] = c


def _pick_time_chunk(T, Bblk, Ep, Hp, x_bytes, budget_bytes, max_unroll):
    """Largest time-chunk Tc whose VMEM working set fits the budget."""
    f32b = 4
    fixed = ((Ep * 4 * Hp + Hp * 4 * Hp) * x_bytes     # single-buffered weights
             + 4 * Hp * f32b                           # bias
             + 2 * Bblk * Hp * f32b)                   # h/c carries
    per_step = Bblk * (2 * Ep * x_bytes                # x chunk, double-buffered
                       + 2 * Hp * f32b                 # out chunk, double-buffered
                       + 4 * Hp * f32b)                # xg scratch
    avail = max(budget_bytes - fixed, per_step)
    cap = max(1, min(int(avail // per_step), max_unroll, T))
    # Keep Tc*Bblk a multiple of 128 rows when possible (full MXU width on v5e).
    align = 128 // math.gcd(Bblk, 128)
    if cap >= align:
        cap = (cap // align) * align
    vmem_need = fixed + per_step * cap
    return cap, vmem_need


def _pad_gate_cols(w, H, Hp):
    """Re-layout the trailing 4*H (i,f,g,o) axis to 4*Hp, zero-padding each gate."""
    if Hp == H:
        return w
    parts = []
    for k in range(4):
        g = w[..., k * H:(k + 1) * H]
        pad = [(0, 0)] * (w.ndim - 1) + [(0, Hp - H)]
        parts.append(jnp.pad(g, pad))
    return jnp.concatenate(parts, axis=-1)


@functools.partial(jax.jit, static_argnames=("matmul_dtype", "batch_blocks",
                                             "vmem_budget_bytes", "max_unroll"))
def lstm_bc_intp_forward(sent_embd, w_ih_t, w_hh_t, b_gates, w_lab_t, b_lab, *,
                         matmul_dtype=jnp.float32, batch_blocks=None,
                         vmem_budget_bytes=48 * 1024 * 1024, max_unroll=64):
    """Returns (y, lstm_out) exactly like LSTMBCintp.forward.

    matmul_dtype=jnp.bfloat16 feeds the MXU bf16 path (f32 accumulation, f32
    cell state / gate math) — recommended for production on v6e/v7x.
    """
    T, B, E = sent_embd.shape
    H = w_hh_t.shape[0]
    f32 = jnp.float32

    # Lane/sublane-aligned padded sizes (gates each own whole 128-lane tiles).
    Hp = _round_up(H, 128)
    Ep = _round_up(E, 128)
    Bp = _round_up(B, 8)

    if batch_blocks is None:
        batch_blocks = 2 if (Bp >= 16 and Bp % 16 == 0) else 1
    n_bblk = int(batch_blocks)
    if Bp % n_bblk != 0 or (Bp // n_bblk) % 8 != 0:
        raise ValueError("batch_blocks must split the padded batch into "
                         "sublane-aligned (multiple of 8) blocks")
    Bblk = Bp // n_bblk

    x_bytes = jnp.dtype(matmul_dtype).itemsize
    Tc, vmem_need = _pick_time_chunk(T, Bblk, Ep, Hp, x_bytes,
                                     vmem_budget_bytes, max_unroll)
    Tp = _round_up(T, Tc)
    n_chunks = Tp // Tc

    # ---- wrapper-side padding / layout plumbing (outside the kernel) -------
    # x: (T,B,E) -> padded (Tp,Bp,Ep) -> (n_bblk, Tp*Bblk, Ep) time-major rows.
    x = jnp.pad(sent_embd, ((0, Tp - T), (0, Bp - B), (0, Ep - E)))
    x = x.astype(matmul_dtype)
    x = x.reshape(Tp, n_bblk, Bblk, Ep).transpose(1, 0, 2, 3)
    x = x.reshape(n_bblk, Tp * Bblk, Ep)

    wih = _pad_gate_cols(jnp.pad(w_ih_t, ((0, Ep - E), (0, 0))), H, Hp)
    whh = _pad_gate_cols(jnp.pad(w_hh_t, ((0, Hp - H), (0, 0))), H, Hp)
    wih = wih.astype(matmul_dtype)                    # (Ep, 4Hp)
    whh = whh.astype(matmul_dtype)                    # (Hp, 4Hp)
    b = _pad_gate_cols(b_gates, H, Hp).astype(f32)    # (1, 4Hp)

    vmem_limit = int(min(56 * 1024 * 1024,
                         max(vmem_need + (8 << 20), 16 << 20)))

    out = pl.pallas_call(
        _lstm_chunk_kernel,
        out_shape=jax.ShapeDtypeStruct((n_bblk, Tp * Bblk, Hp), f32),
        grid_spec=pltpu.PrefetchScalarGridSpec(
            num_scalar_prefetch=0,
            grid=(n_bblk, n_chunks),
            in_specs=[
                pl.BlockSpec((None, Tc * Bblk, Ep),
                             lambda bb, c: (bb, c, 0)),          # x chunk
                pl.BlockSpec(memory_space=pl.ANY),               # W_ih^T (HBM)
                pl.BlockSpec(memory_space=pl.ANY),               # W_hh^T (HBM)
                pl.BlockSpec(memory_space=pl.ANY),               # bias   (HBM)
            ],
            out_specs=pl.BlockSpec((None, Tc * Bblk, Hp),
                                   lambda bb, c: (bb, c, 0)),
            scratch_shapes=[
                pltpu.VMEM((Ep, 4 * Hp), matmul_dtype),          # W_ih^T (1x)
                pltpu.VMEM((Hp, 4 * Hp), matmul_dtype),          # W_hh^T (1x)
                pltpu.VMEM((1, 4 * Hp), f32),                    # bias
                pltpu.VMEM((Tc * Bblk, 4 * Hp), f32),            # xg projection
                pltpu.VMEM((Bblk, Hp), f32),                     # h carry
                pltpu.VMEM((Bblk, Hp), f32),                     # c carry
            ],
        ),
        compiler_params=pltpu.CompilerParams(
            # Batch blocks are independent (megacore on v7x); time chunks form
            # the sequential recurrence.
            dimension_semantics=("parallel", "arbitrary"),
            vmem_limit_bytes=vmem_limit,
        ),
    )(x, wih, whh, b)

    # Undo layout + padding.
    out = out.reshape(n_bblk, Tp, Bblk, Hp).transpose(1, 0, 2, 3)
    out = out.reshape(Tp, Bp, Hp)
    lstm_out = out[:T, :B, :H]

    # hidden2label: (B,H)x(H,L) with L < 128 lanes — kept in plain XLA so the
    # kernel never emits masked partial stores.
    y = lstm_out[-1] @ w_lab_t + b_lab

    return y, lstm_out


def _reference_forward(sent_embd, w_ih_t, w_hh_t, b_gates, w_lab_t, b_lab):
    """Pure-JAX reference (lax.scan) mirroring torch.nn.LSTM math."""
    T, B, E = sent_embd.shape
    H = w_hh_t.shape[0]

    def step(carry, x_t):
        h, c = carry
        gates = x_t @ w_ih_t + h @ w_hh_t + b_gates[0]
        i = jax.nn.sigmoid(gates[:, 0 * H:1 * H])
        f = jax.nn.sigmoid(gates[:, 1 * H:2 * H])
        g = jnp.tanh(gates[:, 2 * H:3 * H])
        o = jax.nn.sigmoid(gates[:, 3 * H:4 * H])
        c = f * c + i * g
        h = o * jnp.tanh(c)
        return (h, c), h

    init = (jnp.zeros((B, H), jnp.float32), jnp.zeros((B, H), jnp.float32))
    (_, _), lstm_out = jax.lax.scan(step, init, sent_embd)
    y = lstm_out[-1] @ w_lab_t + b_lab
    return y, lstm_out


if __name__ == "__main__":
    # Small, module-consistent shapes (seq=8, batch=2, embed=16, hidden=32, labels=4).
    T, B, E, H, L = 8, 2, 16, 32, 4

    key = jax.random.PRNGKey(0)
    ks = jax.random.split(key, 8)

    # Deterministic init, mimicking PyTorch's uniform(-1/sqrt(H), 1/sqrt(H)).
    bound = 1.0 / math.sqrt(H)
    w_ih = jax.random.uniform(ks[0], (4 * H, E), jnp.float32, -bound, bound)
    w_hh = jax.random.uniform(ks[1], (4 * H, H), jnp.float32, -bound, bound)
    b_ih = jax.random.uniform(ks[2], (4 * H,), jnp.float32, -bound, bound)
    b_hh = jax.random.uniform(ks[3], (4 * H,), jnp.float32, -bound, bound)
    w_lab = jax.random.uniform(ks[4], (L, H), jnp.float32, -bound, bound)
    b_lab = jax.random.uniform(ks[5], (L,), jnp.float32, -bound, bound)

    sent_embd = jax.random.normal(ks[6], (T, B, E), jnp.float32)

    # Kernel-friendly parameter layout (host-side, one-time).
    w_ih_t = jnp.transpose(w_ih)            # (E, 4H)
    w_hh_t = jnp.transpose(w_hh)            # (H, 4H)
    b_gates = (b_ih + b_hh)[None, :]        # (1, 4H)
    w_lab_t = jnp.transpose(w_lab)          # (H, L)
    b_lab2 = b_lab[None, :]                 # (1, L)

    # Pure-JAX reference.
    y_ref, out_ref = _reference_forward(
        sent_embd, w_ih_t, w_hh_t, b_gates, w_lab_t, b_lab2)

    # f32-operand run (matches PyTorch f32 semantics).
    y, lstm_out = lstm_bc_intp_forward(
        sent_embd, w_ih_t, w_hh_t, b_gates, w_lab_t, b_lab2)
    jax.block_until_ready((y, lstm_out))
    assert jnp.allclose(lstm_out, out_ref, rtol=1e-4, atol=1e-4)
    assert jnp.allclose(y, y_ref, rtol=1e-4, atol=1e-4)

    # bf16 MXU-operand run (f32 accumulation + f32 cell state) — production path.
    y_bf, out_bf = lstm_bc_intp_forward(
        sent_embd, w_ih_t, w_hh_t, b_gates, w_lab_t, b_lab2,
        matmul_dtype=jnp.bfloat16)
    jax.block_until_ready((y_bf, out_bf))
    assert jnp.allclose(out_bf, out_ref, rtol=5e-2, atol=5e-2)
    assert jnp.allclose(y_bf, y_ref, rtol=5e-2, atol=5e-2)

    print("KERNEL_OK")
</pallas_src>

<mosaic_0001>
module attributes {stable_mosaic.version = 11 : i64} {
  func.func @_lstm_chunk_kernel(%arg0: i32, %arg1: i32, %arg2: memref<1x64x128xf32, #tpu.memory_space<vmem>>, %arg3: memref<128x512xf32, #tpu.memory_space<any>>, %arg4: memref<128x512xf32, #tpu.memory_space<any>>, %arg5: memref<1x512xf32, #tpu.memory_space<any>>, %arg6: memref<1x64x128xf32, #tpu.memory_space<vmem>>, %arg7: memref<128x512xf32, #tpu.memory_space<vmem>>, %arg8: memref<128x512xf32, #tpu.memory_space<vmem>>, %arg9: memref<1x512xf32, #tpu.memory_space<vmem>>, %arg10: memref<64x512xf32, #tpu.memory_space<vmem>>, %arg11: memref<8x128xf32, #tpu.memory_space<vmem>>, %arg12: memref<8x128xf32, #tpu.memory_space<vmem>>) attributes {dimension_semantics = [#tpu.dimension_semantics<parallel>, #tpu.dimension_semantics<arbitrary>], iteration_bounds = array<i64: 1, 1>, scalar_prefetch = 0 : i64, scratch_operands = 6 : i64, tpu.core_type = #tpu.core_type<tc>, window_params = [{transform_indices = @transform_0, window_bounds = array<i64: 1, 64, 128>}, {}, {}, {}, {transform_indices = @transform_4, window_bounds = array<i64: 1, 64, 128>}]} {
    %c0_i32 = arith.constant 0 : i32
    %0 = arith.cmpi eq, %arg1, %c0_i32 : i32
    %1 = arith.extui %0 : i1 to i32
    %c0_i32_0 = arith.constant 0 : i32
    %2 = arith.cmpi ne, %1, %c0_i32_0 : i32
    scf.if %2 {
      "tpu.region"() ({
        %268 = tpu.sem_alloc : memref<!tpu.dma_semaphore, #tpu.memory_space<semaphore_mem>>
        tpu.enqueue_dma source(%arg3 : memref<128x512xf32, #tpu.memory_space<any>>) target(%arg7 : memref<128x512xf32, #tpu.memory_space<vmem>>) target_semaphore(%268 : memref<!tpu.dma_semaphore, #tpu.memory_space<semaphore_mem>>)
        tpu.wait_dma2 semaphore(%268 : memref<!tpu.dma_semaphore, #tpu.memory_space<semaphore_mem>>) src(%arg3 : memref<128x512xf32, #tpu.memory_space<any>>) dst(%arg7 : memref<128x512xf32, #tpu.memory_space<vmem>>)
        tpu.yield
      }) : () -> ()
      "tpu.region"() ({
        %268 = tpu.sem_alloc : memref<!tpu.dma_semaphore, #tpu.memory_space<semaphore_mem>>
        tpu.enqueue_dma source(%arg4 : memref<128x512xf32, #tpu.memory_space<any>>) target(%arg8 : memref<128x512xf32, #tpu.memory_space<vmem>>) target_semaphore(%268 : memref<!tpu.dma_semaphore, #tpu.memory_space<semaphore_mem>>)
        tpu.wait_dma2 semaphore(%268 : memref<!tpu.dma_semaphore, #tpu.memory_space<semaphore_mem>>) src(%arg4 : memref<128x512xf32, #tpu.memory_space<any>>) dst(%arg8 : memref<128x512xf32, #tpu.memory_space<vmem>>)
        tpu.yield
      }) : () -> ()
      "tpu.region"() ({
        %268 = tpu.sem_alloc : memref<!tpu.dma_semaphore, #tpu.memory_space<semaphore_mem>>
        tpu.enqueue_dma source(%arg5 : memref<1x512xf32, #tpu.memory_space<any>>) target(%arg9 : memref<1x512xf32, #tpu.memory_space<vmem>>) target_semaphore(%268 : memref<!tpu.dma_semaphore, #tpu.memory_space<semaphore_mem>>)
        tpu.wait_dma2 semaphore(%268 : memref<!tpu.dma_semaphore, #tpu.memory_space<semaphore_mem>>) src(%arg5 : memref<1x512xf32, #tpu.memory_space<any>>) dst(%arg9 : memref<1x512xf32, #tpu.memory_space<vmem>>)
        tpu.yield
      }) : () -> ()
      %cst_84 = arith.constant 0.000000e+00 : f32
      %264 = vector.broadcast %cst_84 : f32 to vector<8x128xf32>
      %c0_85 = arith.constant 0 : index
      %c0_86 = arith.constant 0 : index
      %265 = vector.load %arg11[%c0_85, %c0_86] : memref<8x128xf32, #tpu.memory_space<vmem>>, vector<8x128xf32>
      tpu.vector_store %arg11[%c0_85, %c0_86], %264 {strides = array<i32>} : memref<8x128xf32, #tpu.memory_space<vmem>>, vector<8x128xf32>,
      %cst_87 = arith.constant 0.000000e+00 : f32
      %266 = vector.broadcast %cst_87 : f32 to vector<8x128xf32>
      %c0_88 = arith.constant 0 : index
      %c0_89 = arith.constant 0 : index
      %267 = vector.load %arg12[%c0_88, %c0_89] : memref<8x128xf32, #tpu.memory_space<vmem>>, vector<8x128xf32>
      tpu.vector_store %arg12[%c0_88, %c0_89], %266 {strides = array<i32>} : memref<8x128xf32, #tpu.memory_space<vmem>>, vector<8x128xf32>,
    } else {
    }
    %c0 = arith.constant 0 : index
    %c0_1 = arith.constant 0 : index
    %c0_2 = arith.constant 0 : index
    %3 = vector.load %arg2[%c0, %c0_1, %c0_2] : memref<1x64x128xf32, #tpu.memory_space<vmem>>, vector<1x64x128xf32>
    %4 = vector.shape_cast %3 : vector<1x64x128xf32> to vector<64x128xf32>
    %c0_3 = arith.constant 0 : index
    %c0_4 = arith.constant 0 : index
    %5 = vector.load %arg7[%c0_3, %c0_4] : memref<128x512xf32, #tpu.memory_space<vmem>>, vector<128x512xf32>
    %cst = arith.constant dense<0.000000e+00> : vector<64x512xf32>
    %6 = tpu.matmul %4, %5, %cst {dimension_numbers = #tpu.dot_dimension_numbers<[1], [0], [0], [1], [0, 0, 1, 1], [], []>} : vector<64x128xf32>, vector<128x512xf32>, vector<64x512xf32> -> vector<64x512xf32>
    %c0_5 = arith.constant 0 : index
    %c0_6 = arith.constant 0 : index
    %7 = vector.load %arg9[%c0_5, %c0_6] : memref<1x512xf32, #tpu.memory_space<vmem>>, vector<1x512xf32>
    %8 = vector.broadcast %7 : vector<1x512xf32> to vector<64x512xf32>
    %9 = arith.addf %6, %8 : vector<64x512xf32>
    %c0_7 = arith.constant 0 : index
    %c0_8 = arith.constant 0 : index
    %10 = vector.load %arg10[%c0_7, %c0_8] : memref<64x512xf32, #tpu.memory_space<vmem>>, vector<64x512xf32>
    tpu.vector_store %arg10[%c0_7, %c0_8], %9 {strides = array<i32>} : memref<64x512xf32, #tpu.memory_space<vmem>>, vector<64x512xf32>,
    %c0_9 = arith.constant 0 : index
    %c0_10 = arith.constant 0 : index
    %11 = vector.load %arg8[%c0_9, %c0_10] : memref<128x512xf32, #tpu.memory_space<vmem>>, vector<128x512xf32>
    %c0_11 = arith.constant 0 : index
    %c0_12 = arith.constant 0 : index
    %12 = vector.load %arg11[%c0_11, %c0_12] : memref<8x128xf32, #tpu.memory_space<vmem>>, vector<8x128xf32>
    %c0_13 = arith.constant 0 : index
    %c0_14 = arith.constant 0 : index
    %13 = vector.load %arg12[%c0_13, %c0_14] : memref<8x128xf32, #tpu.memory_space<vmem>>, vector<8x128xf32>
    %c0_15 = arith.constant 0 : index
    %c0_16 = arith.constant 0 : index
    %14 = vector.load %arg10[%c0_15, %c0_16] : memref<64x512xf32, #tpu.memory_space<vmem>>, vector<8x512xf32>
    %cst_17 = arith.constant dense<0.000000e+00> : vector<8x512xf32>
    %15 = tpu.matmul %12, %11, %cst_17 {dimension_numbers = #tpu.dot_dimension_numbers<[1], [0], [0], [1], [0, 0, 1, 1], [], []>} : vector<8x128xf32>, vector<128x512xf32>, vector<8x512xf32> -> vector<8x512xf32>
    %16 = arith.addf %14, %15 : vector<8x512xf32>
    %17 = vector.extract_strided_slice %16 {offsets = [0, 0], sizes = [8, 128], strides = [1, 1]} : vector<8x512xf32> to vector<8x128xf32>
    %18 = arith.negf %17 : vector<8x128xf32>
    %19 = math.exp %18 : vector<8x128xf32>
    %cst_18 = arith.constant 1.000000e+00 : f32
    %20 = vector.broadcast %cst_18 : f32 to vector<8x128xf32>
    %21 = arith.addf %20, %19 : vector<8x128xf32>
    %22 = arith.divf %20, %21 : vector<8x128xf32>
    %23 = vector.extract_strided_slice %16 {offsets = [0, 128], sizes = [8, 128], strides = [1, 1]} : vector<8x512xf32> to vector<8x128xf32>
    %24 = arith.negf %23 : vector<8x128xf32>
    %25 = math.exp %24 : vector<8x128xf32>
    %cst_19 = arith.constant 1.000000e+00 : f32
    %26 = vector.broadcast %cst_19 : f32 to vector<8x128xf32>
    %27 = arith.addf %26, %25 : vector<8x128xf32>
    %28 = arith.divf %26, %27 : vector<8x128xf32>
    %29 = vector.extract_strided_slice %16 {offsets = [0, 256], sizes = [8, 128], strides = [1, 1]} : vector<8x512xf32> to vector<8x128xf32>
    %30 = math.tanh %29 : vector<8x128xf32>
    %31 = vector.extract_strided_slice %16 {offsets = [0, 384], sizes = [8, 128], strides = [1, 1]} : vector<8x512xf32> to vector<8x128xf32>
    %32 = arith.negf %31 : vector<8x128xf32>
    %33 = math.exp %32 : vector<8x128xf32>
    %cst_20 = arith.constant 1.000000e+00 : f32
    %34 = vector.broadcast %cst_20 : f32 to vector<8x128xf32>
    %35 = arith.addf %34, %33 : vector<8x128xf32>
    %36 = arith.divf %34, %35 : vector<8x128xf32>
    %37 = arith.mulf %28, %13 : vector<8x128xf32>
    %38 = arith.mulf %22, %30 : vector<8x128xf32>
    %39 = arith.addf %37, %38 : vector<8x128xf32>
    %40 = math.tanh %39 : vector<8x128xf32>
    %41 = arith.mulf %36, %40 : vector<8x128xf32>
    %c0_21 = arith.constant 0 : index
    %c0_22 = arith.constant 0 : index
    %c0_23 = arith.constant 0 : index
    %42 = vector.load %arg6[%c0_21, %c0_22, %c0_23] : memref<1x64x128xf32, #tpu.memory_space<vmem>>, vector<1x8x128xf32>
    %43 = vector.shape_cast %42 : vector<1x8x128xf32> to vector<8x128xf32>
    %44 = vector.shape_cast %41 : vector<8x128xf32> to vector<1x8x128xf32>
    tpu.vector_store %arg6[%c0_21, %c0_22, %c0_23], %44 {strides = array<i32>} : memref<1x64x128xf32, #tpu.memory_space<vmem>>, vector<1x8x128xf32>,
    %c8 = arith.constant 8 : index
    %c0_24 = arith.constant 0 : index
    %45 = vector.load %arg10[%c8, %c0_24] : memref<64x512xf32, #tpu.memory_space<vmem>>, vector<8x512xf32>
    %cst_25 = arith.constant dense<0.000000e+00> : vector<8x512xf32>
    %46 = tpu.matmul %41, %11, %cst_25 {dimension_numbers = #tpu.dot_dimension_numbers<[1], [0], [0], [1], [0, 0, 1, 1], [], []>} : vector<8x128xf32>, vector<128x512xf32>, vector<8x512xf32> -> vector<8x512xf32>
    %47 = arith.addf %45, %46 : vector<8x512xf32>
    %48 = vector.extract_strided_slice %47 {offsets = [0, 0], sizes = [8, 128], strides = [1, 1]} : vector<8x512xf32> to vector<8x128xf32>
    %49 = arith.negf %48 : vector<8x128xf32>
    %50 = math.exp %49 : vector<8x128xf32>
    %cst_26 = arith.constant 1.000000e+00 : f32
    %51 = vector.broadcast %cst_26 : f32 to vector<8x128xf32>
    %52 = arith.addf %51, %50 : vector<8x128xf32>
    %53 = arith.divf %51, %52 : vector<8x128xf32>
    %54 = vector.extract_strided_slice %47 {offsets = [0, 128], sizes = [8, 128], strides = [1, 1]} : vector<8x512xf32> to vector<8x128xf32>
    %55 = arith.negf %54 : vector<8x128xf32>
    %56 = math.exp %55 : vector<8x128xf32>
    %cst_27 = arith.constant 1.000000e+00 : f32
    %57 = vector.broadcast %cst_27 : f32 to vector<8x128xf32>
    %58 = arith.addf %57, %56 : vector<8x128xf32>
    %59 = arith.divf %57, %58 : vector<8x128xf32>
    %60 = vector.extract_strided_slice %47 {offsets = [0, 256], sizes = [8, 128], strides = [1, 1]} : vector<8x512xf32> to vector<8x128xf32>
    %61 = math.tanh %60 : vector<8x128xf32>
    %62 = vector.extract_strided_slice %47 {offsets = [0, 384], sizes = [8, 128], strides = [1, 1]} : vector<8x512xf32> to vector<8x128xf32>
    %63 = arith.negf %62 : vector<8x128xf32>
    %64 = math.exp %63 : vector<8x128xf32>
    %cst_28 = arith.constant 1.000000e+00 : f32
    %65 = vector.broadcast %cst_28 : f32 to vector<8x128xf32>
    %66 = arith.addf %65, %64 : vector<8x128xf32>
    %67 = arith.divf %65, %66 : vector<8x128xf32>
    %68 = arith.mulf %59, %39 : vector<8x128xf32>
    %69 = arith.mulf %53, %61 : vector<8x128xf32>
    %70 = arith.addf %68, %69 : vector<8x128xf32>
    %71 = math.tanh %70 : vector<8x128xf32>
    %72 = arith.mulf %67, %71 : vector<8x128xf32>
    %c0_29 = arith.constant 0 : index
    %c8_30 = arith.constant 8 : index
    %c0_31 = arith.constant 0 : index
    %73 = vector.load %arg6[%c0_29, %c8_30, %c0_31] : memref<1x64x128xf32, #tpu.memory_space<vmem>>, vector<1x8x128xf32>
    %74 = vector.shape_cast %73 : vector<1x8x128xf32> to vector<8x128xf32>
    %75 = vector.shape_cast %72 : vector<8x128xf32> to vector<1x8x128xf32>
    tpu.vector_store %arg6[%c0_29, %c8_30, %c0_31], %75 {strides = array<i32>} : memref<1x64x128xf32, #tpu.memory_space<vmem>>, vector<1x8x128xf32>,
    %c16 = arith.constant 16 : index
    %c0_32 = arith.constant 0 : index
    %76 = vector.load %arg10[%c16, %c0_32] : memref<64x512xf32, #tpu.memory_space<vmem>>, vector<8x512xf32>
    %cst_33 = arith.constant dense<0.000000e+00> : vector<8x512xf32>
    %77 = tpu.matmul %72, %11, %cst_33 {dimension_numbers = #tpu.dot_dimension_numbers<[1], [0], [0], [1], [0, 0, 1, 1], [], []>} : vector<8x128xf32>, vector<128x512xf32>, vector<8x512xf32> -> vector<8x512xf32>
    %78 = arith.addf %76, %77 : vector<8x512xf32>
    %79 = vector.extract_strided_slice %78 {offsets = [0, 0], sizes = [8, 128], strides = [1, 1]} : vector<8x512xf32> to vector<8x128xf32>
    %80 = arith.negf %79 : vector<8x128xf32>
    %81 = math.exp %80 : vector<8x128xf32>
    %cst_34 = arith.constant 1.000000e+00 : f32
    %82 = vector.broadcast %cst_34 : f32 to vector<8x128xf32>
    %83 = arith.addf %82, %81 : vector<8x128xf32>
    %84 = arith.divf %82, %83 : vector<8x128xf32>
    %85 = vector.extract_strided_slice %78 {offsets = [0, 128], sizes = [8, 128], strides = [1, 1]} : vector<8x512xf32> to vector<8x128xf32>
    %86 = arith.negf %85 : vector<8x128xf32>
    %87 = math.exp %86 : vector<8x128xf32>
    %cst_35 = arith.constant 1.000000e+00 : f32
    %88 = vector.broadcast %cst_35 : f32 to vector<8x128xf32>
    %89 = arith.addf %88, %87 : vector<8x128xf32>
    %90 = arith.divf %88, %89 : vector<8x128xf32>
    %91 = vector.extract_strided_slice %78 {offsets = [0, 256], sizes = [8, 128], strides = [1, 1]} : vector<8x512xf32> to vector<8x128xf32>
    %92 = math.tanh %91 : vector<8x128xf32>
    %93 = vector.extract_strided_slice %78 {offsets = [0, 384], sizes = [8, 128], strides = [1, 1]} : vector<8x512xf32> to vector<8x128xf32>
    %94 = arith.negf %93 : vector<8x128xf32>
    %95 = math.exp %94 : vector<8x128xf32>
    %cst_36 = arith.constant 1.000000e+00 : f32
    %96 = vector.broadcast %cst_36 : f32 to vector<8x128xf32>
    %97 = arith.addf %96, %95 : vector<8x128xf32>
    %98 = arith.divf %96, %97 : vector<8x128xf32>
    %99 = arith.mulf %90, %70 : vector<8x128xf32>
    %100 = arith.mulf %84, %92 : vector<8x128xf32>
    %101 = arith.addf %99, %100 : vector<8x128xf32>
    %102 = math.tanh %101 : vector<8x128xf32>
    %103 = arith.mulf %98, %102 : vector<8x128xf32>
    %c0_37 = arith.constant 0 : index
    %c16_38 = arith.constant 16 : index
    %c0_39 = arith.constant 0 : index
    %104 = vector.load %arg6[%c0_37, %c16_38, %c0_39] : memref<1x64x128xf32, #tpu.memory_space<vmem>>, vector<1x8x128xf32>
    %105 = vector.shape_cast %104 : vector<1x8x128xf32> to vector<8x128xf32>
    %106 = vector.shape_cast %103 : vector<8x128xf32> to vector<1x8x128xf32>
    tpu.vector_store %arg6[%c0_37, %c16_38, %c0_39], %106 {strides = array<i32>} : memref<1x64x128xf32, #tpu.memory_space<vmem>>, vector<1x8x128xf32>,
    %c24 = arith.constant 24 : index
    %c0_40 = arith.constant 0 : index
    %107 = vector.load %arg10[%c24, %c0_40] : memref<64x512xf32, #tpu.memory_space<vmem>>, vector<8x512xf32>
    %cst_41 = arith.constant dense<0.000000e+00> : vector<8x512xf32>
    %108 = tpu.matmul %103, %11, %cst_41 {dimension_numbers = #tpu.dot_dimension_numbers<[1], [0], [0], [1], [0, 0, 1, 1], [], []>} : vector<8x128xf32>, vector<128x512xf32>, vector<8x512xf32> -> vector<8x512xf32>
    %109 = arith.addf %107, %108 : vector<8x512xf32>
    %110 = vector.extract_strided_slice %109 {offsets = [0, 0], sizes = [8, 128], strides = [1, 1]} : vector<8x512xf32> to vector<8x128xf32>
    %111 = arith.negf %110 : vector<8x128xf32>
    %112 = math.exp %111 : vector<8x128xf32>
    %cst_42 = arith.constant 1.000000e+00 : f32
    %113 = vector.broadcast %cst_42 : f32 to vector<8x128xf32>
    %114 = arith.addf %113, %112 : vector<8x128xf32>
    %115 = arith.divf %113, %114 : vector<8x128xf32>
    %116 = vector.extract_strided_slice %109 {offsets = [0, 128], sizes = [8, 128], strides = [1, 1]} : vector<8x512xf32> to vector<8x128xf32>
    %117 = arith.negf %116 : vector<8x128xf32>
    %118 = math.exp %117 : vector<8x128xf32>
    %cst_43 = arith.constant 1.000000e+00 : f32
    %119 = vector.broadcast %cst_43 : f32 to vector<8x128xf32>
    %120 = arith.addf %119, %118 : vector<8x128xf32>
    %121 = arith.divf %119, %120 : vector<8x128xf32>
    %122 = vector.extract_strided_slice %109 {offsets = [0, 256], sizes = [8, 128], strides = [1, 1]} : vector<8x512xf32> to vector<8x128xf32>
    %123 = math.tanh %122 : vector<8x128xf32>
    %124 = vector.extract_strided_slice %109 {offsets = [0, 384], sizes = [8, 128], strides = [1, 1]} : vector<8x512xf32> to vector<8x128xf32>
    %125 = arith.negf %124 : vector<8x128xf32>
    %126 = math.exp %125 : vector<8x128xf32>
    %cst_44 = arith.constant 1.000000e+00 : f32
    %127 = vector.broadcast %cst_44 : f32 to vector<8x128xf32>
    %128 = arith.addf %127, %126 : vector<8x128xf32>
    %129 = arith.divf %127, %128 : vector<8x128xf32>
    %130 = arith.mulf %121, %101 : vector<8x128xf32>
    %131 = arith.mulf %115, %123 : vector<8x128xf32>
    %132 = arith.addf %130, %131 : vector<8x128xf32>
    %133 = math.tanh %132 : vector<8x128xf32>
    %134 = arith.mulf %129, %133 : vector<8x128xf32>
    %c0_45 = arith.constant 0 : index
    %c24_46 = arith.constant 24 : index
    %c0_47 = arith.constant 0 : index
    %135 = vector.load %arg6[%c0_45, %c24_46, %c0_47] : memref<1x64x128xf32, #tpu.memory_space<vmem>>, vector<1x8x128xf32>
    %136 = vector.shape_cast %135 : vector<1x8x128xf32> to vector<8x128xf32>
    %137 = vector.shape_cast %134 : vector<8x128xf32> to vector<1x8x128xf32>
    tpu.vector_store %arg6[%c0_45, %c24_46, %c0_47], %137 {strides = array<i32>} : memref<1x64x128xf32, #tpu.memory_space<vmem>>, vector<1x8x128xf32>,
    %c32 = arith.constant 32 : index
    %c0_48 = arith.constant 0 : index
    %138 = vector.load %arg10[%c32, %c0_48] : memref<64x512xf32, #tpu.memory_space<vmem>>, vector<8x512xf32>
    %cst_49 = arith.constant dense<0.000000e+00> : vector<8x512xf32>
    %139 = tpu.matmul %134, %11, %cst_49 {dimension_numbers = #tpu.dot_dimension_numbers<[1], [0], [0], [1], [0, 0, 1, 1], [], []>} : vector<8x128xf32>, vector<128x512xf32>, vector<8x512xf32> -> vector<8x512xf32>
    %140 = arith.addf %138, %139 : vector<8x512xf32>
    %141 = vector.extract_strided_slice %140 {offsets = [0, 0], sizes = [8, 128], strides = [1, 1]} : vector<8x512xf32> to vector<8x128xf32>
    %142 = arith.negf %141 : vector<8x128xf32>
    %143 = math.exp %142 : vector<8x128xf32>
    %cst_50 = arith.constant 1.000000e+00 : f32
    %144 = vector.broadcast %cst_50 : f32 to vector<8x128xf32>
    %145 = arith.addf %144, %143 : vector<8x128xf32>
    %146 = arith.divf %144, %145 : vector<8x128xf32>
    %147 = vector.extract_strided_slice %140 {offsets = [0, 128], sizes = [8, 128], strides = [1, 1]} : vector<8x512xf32> to vector<8x128xf32>
    %148 = arith.negf %147 : vector<8x128xf32>
    %149 = math.exp %148 : vector<8x128xf32>
    %cst_51 = arith.constant 1.000000e+00 : f32
    %150 = vector.broadcast %cst_51 : f32 to vector<8x128xf32>
    %151 = arith.addf %150, %149 : vector<8x128xf32>
    %152 = arith.divf %150, %151 : vector<8x128xf32>
    %153 = vector.extract_strided_slice %140 {offsets = [0, 256], sizes = [8, 128], strides = [1, 1]} : vector<8x512xf32> to vector<8x128xf32>
    %154 = math.tanh %153 : vector<8x128xf32>
    %155 = vector.extract_strided_slice %140 {offsets = [0, 384], sizes = [8, 128], strides = [1, 1]} : vector<8x512xf32> to vector<8x128xf32>
    %156 = arith.negf %155 : vector<8x128xf32>
    %157 = math.exp %156 : vector<8x128xf32>
    %cst_52 = arith.constant 1.000000e+00 : f32
    %158 = vector.broadcast %cst_52 : f32 to vector<8x128xf32>
    %159 = arith.addf %158, %157 : vector<8x128xf32>
    %160 = arith.divf %158, %159 : vector<8x128xf32>
    %161 = arith.mulf %152, %132 : vector<8x128xf32>
    %162 = arith.mulf %146, %154 : vector<8x128xf32>
    %163 = arith.addf %161, %162 : vector<8x128xf32>
    %164 = math.tanh %163 : vector<8x128xf32>
    %165 = arith.mulf %160, %164 : vector<8x128xf32>
    %c0_53 = arith.constant 0 : index
    %c32_54 = arith.constant 32 : index
    %c0_55 = arith.constant 0 : index
    %166 = vector.load %arg6[%c0_53, %c32_54, %c0_55] : memref<1x64x128xf32, #tpu.memory_space<vmem>>, vector<1x8x128xf32>
    %167 = vector.shape_cast %166 : vector<1x8x128xf32> to vector<8x128xf32>
    %168 = vector.shape_cast %165 : vector<8x128xf32> to vector<1x8x128xf32>
    tpu.vector_store %arg6[%c0_53, %c32_54, %c0_55], %168 {strides = array<i32>} : memref<1x64x128xf32, #tpu.memory_space<vmem>>, vector<1x8x128xf32>,
    %c40 = arith.constant 40 : index
    %c0_56 = arith.constant 0 : index
    %169 = vector.load %arg10[%c40, %c0_56] : memref<64x512xf32, #tpu.memory_space<vmem>>, vector<8x512xf32>
    %cst_57 = arith.constant dense<0.000000e+00> : vector<8x512xf32>
    %170 = tpu.matmul %165, %11, %cst_57 {dimension_numbers = #tpu.dot_dimension_numbers<[1], [0], [0], [1], [0, 0, 1, 1], [], []>} : vector<8x128xf32>, vector<128x512xf32>, vector<8x512xf32> -> vector<8x512xf32>
    %171 = arith.addf %169, %170 : vector<8x512xf32>
    %172 = vector.extract_strided_slice %171 {offsets = [0, 0], sizes = [8, 128], strides = [1, 1]} : vector<8x512xf32> to vector<8x128xf32>
    %173 = arith.negf %172 : vector<8x128xf32>
    %174 = math.exp %173 : vector<8x128xf32>
    %cst_58 = arith.constant 1.000000e+00 : f32
    %175 = vector.broadcast %cst_58 : f32 to vector<8x128xf32>
    %176 = arith.addf %175, %174 : vector<8x128xf32>
    %177 = arith.divf %175, %176 : vector<8x128xf32>
    %178 = vector.extract_strided_slice %171 {offsets = [0, 128], sizes = [8, 128], strides = [1, 1]} : vector<8x512xf32> to vector<8x128xf32>
    %179 = arith.negf %178 : vector<8x128xf32>
    %180 = math.exp %179 : vector<8x128xf32>
    %cst_59 = arith.constant 1.000000e+00 : f32
    %181 = vector.broadcast %cst_59 : f32 to vector<8x128xf32>
    %182 = arith.addf %181, %180 : vector<8x128xf32>
    %183 = arith.divf %181, %182 : vector<8x128xf32>
    %184 = vector.extract_strided_slice %171 {offsets = [0, 256], sizes = [8, 128], strides = [1, 1]} : vector<8x512xf32> to vector<8x128xf32>
    %185 = math.tanh %184 : vector<8x128xf32>
    %186 = vector.extract_strided_slice %171 {offsets = [0, 384], sizes = [8, 128], strides = [1, 1]} : vector<8x512xf32> to vector<8x128xf32>
    %187 = arith.negf %186 : vector<8x128xf32>
    %188 = math.exp %187 : vector<8x128xf32>
    %cst_60 = arith.constant 1.000000e+00 : f32
    %189 = vector.broadcast %cst_60 : f32 to vector<8x128xf32>
    %190 = arith.addf %189, %188 : vector<8x128xf32>
    %191 = arith.divf %189, %190 : vector<8x128xf32>
    %192 = arith.mulf %183, %163 : vector<8x128xf32>
    %193 = arith.mulf %177, %185 : vector<8x128xf32>
    %194 = arith.addf %192, %193 : vector<8x128xf32>
    %195 = math.tanh %194 : vector<8x128xf32>
    %196 = arith.mulf %191, %195 : vector<8x128xf32>
    %c0_61 = arith.constant 0 : index
    %c40_62 = arith.constant 40 : index
    %c0_63 = arith.constant 0 : index
    %197 = vector.load %arg6[%c0_61, %c40_62, %c0_63] : memref<1x64x128xf32, #tpu.memory_space<vmem>>, vector<1x8x128xf32>
    %198 = vector.shape_cast %197 : vector<1x8x128xf32> to vector<8x128xf32>
    %199 = vector.shape_cast %196 : vector<8x128xf32> to vector<1x8x128xf32>
    tpu.vector_store %arg6[%c0_61, %c40_62, %c0_63], %199 {strides = array<i32>} : memref<1x64x128xf32, #tpu.memory_space<vmem>>, vector<1x8x128xf32>,
    %c48 = arith.constant 48 : index
    %c0_64 = arith.constant 0 : index
    %200 = vector.load %arg10[%c48, %c0_64] : memref<64x512xf32, #tpu.memory_space<vmem>>, vector<8x512xf32>
    %cst_65 = arith.constant dense<0.000000e+00> : vector<8x512xf32>
    %201 = tpu.matmul %196, %11, %cst_65 {dimension_numbers = #tpu.dot_dimension_numbers<[1], [0], [0], [1], [0, 0, 1, 1], [], []>} : vector<8x128xf32>, vector<128x512xf32>, vector<8x512xf32> -> vector<8x512xf32>
    %202 = arith.addf %200, %201 : vector<8x512xf32>
    %203 = vector.extract_strided_slice %202 {offsets = [0, 0], sizes = [8, 128], strides = [1, 1]} : vector<8x512xf32> to vector<8x128xf32>
    %204 = arith.negf %203 : vector<8x128xf32>
    %205 = math.exp %204 : vector<8x128xf32>
    %cst_66 = arith.constant 1.000000e+00 : f32
    %206 = vector.broadcast %cst_66 : f32 to vector<8x128xf32>
    %207 = arith.addf %206, %205 : vector<8x128xf32>
    %208 = arith.divf %206, %207 : vector<8x128xf32>
    %209 = vector.extract_strided_slice %202 {offsets = [0, 128], sizes = [8, 128], strides = [1, 1]} : vector<8x512xf32> to vector<8x128xf32>
    %210 = arith.negf %209 : vector<8x128xf32>
    %211 = math.exp %210 : vector<8x128xf32>
    %cst_67 = arith.constant 1.000000e+00 : f32
    %212 = vector.broadcast %cst_67 : f32 to vector<8x128xf32>
    %213 = arith.addf %212, %211 : vector<8x128xf32>
    %214 = arith.divf %212, %213 : vector<8x128xf32>
    %215 = vector.extract_strided_slice %202 {offsets = [0, 256], sizes = [8, 128], strides = [1, 1]} : vector<8x512xf32> to vector<8x128xf32>
    %216 = math.tanh %215 : vector<8x128xf32>
    %217 = vector.extract_strided_slice %202 {offsets = [0, 384], sizes = [8, 128], strides = [1, 1]} : vector<8x512xf32> to vector<8x128xf32>
    %218 = arith.negf %217 : vector<8x128xf32>
    %219 = math.exp %218 : vector<8x128xf32>
    %cst_68 = arith.constant 1.000000e+00 : f32
    %220 = vector.broadcast %cst_68 : f32 to vector<8x128xf32>
    %221 = arith.addf %220, %219 : vector<8x128xf32>
    %222 = arith.divf %220, %221 : vector<8x128xf32>
    %223 = arith.mulf %214, %194 : vector<8x128xf32>
    %224 = arith.mulf %208, %216 : vector<8x128xf32>
    %225 = arith.addf %223, %224 : vector<8x128xf32>
    %226 = math.tanh %225 : vector<8x128xf32>
    %227 = arith.mulf %222, %226 : vector<8x128xf32>
    %c0_69 = arith.constant 0 : index
    %c48_70 = arith.constant 48 : index
    %c0_71 = arith.constant 0 : index
    %228 = vector.load %arg6[%c0_69, %c48_70, %c0_71] : memref<1x64x128xf32, #tpu.memory_space<vmem>>, vector<1x8x128xf32>
    %229 = vector.shape_cast %228 : vector<1x8x128xf32> to vector<8x128xf32>
    %230 = vector.shape_cast %227 : vector<8x128xf32> to vector<1x8x128xf32>
    tpu.vector_store %arg6[%c0_69, %c48_70, %c0_71], %230 {strides = array<i32>} : memref<1x64x128xf32, #tpu.memory_space<vmem>>, vector<1x8x128xf32>,
    %c56 = arith.constant 56 : index
    %c0_72 = arith.constant 0 : index
    %231 = vector.load %arg10[%c56, %c0_72] : memref<64x512xf32, #tpu.memory_space<vmem>>, vector<8x512xf32>
    %cst_73 = arith.constant dense<0.000000e+00> : vector<8x512xf32>
    %232 = tpu.matmul %227, %11, %cst_73 {dimension_numbers = #tpu.dot_dimension_numbers<[1], [0], [0], [1], [0, 0, 1, 1], [], []>} : vector<8x128xf32>, vector<128x512xf32>, vector<8x512xf32> -> vector<8x512xf32>
    %233 = arith.addf %231, %232 : vector<8x512xf32>
    %234 = vector.extract_strided_slice %233 {offsets = [0, 0], sizes = [8, 128], strides = [1, 1]} : vector<8x512xf32> to vector<8x128xf32>
    %235 = arith.negf %234 : vector<8x128xf32>
    %236 = math.exp %235 : vector<8x128xf32>
    %cst_74 = arith.constant 1.000000e+00 : f32
    %237 = vector.broadcast %cst_74 : f32 to vector<8x128xf32>
    %238 = arith.addf %237, %236 : vector<8x128xf32>
    %239 = arith.divf %237, %238 : vector<8x128xf32>
    %240 = vector.extract_strided_slice %233 {offsets = [0, 128], sizes = [8, 128], strides = [1, 1]} : vector<8x512xf32> to vector<8x128xf32>
    %241 = arith.negf %240 : vector<8x128xf32>
    %242 = math.exp %241 : vector<8x128xf32>
    %cst_75 = arith.constant 1.000000e+00 : f32
    %243 = vector.broadcast %cst_75 : f32 to vector<8x128xf32>
    %244 = arith.addf %243, %242 : vector<8x128xf32>
    %245 = arith.divf %243, %244 : vector<8x128xf32>
    %246 = vector.extract_strided_slice %233 {offsets = [0, 256], sizes = [8, 128], strides = [1, 1]} : vector<8x512xf32> to vector<8x128xf32>
    %247 = math.tanh %246 : vector<8x128xf32>
    %248 = vector.extract_strided_slice %233 {offsets = [0, 384], sizes = [8, 128], strides = [1, 1]} : vector<8x512xf32> to vector<8x128xf32>
    %249 = arith.negf %248 : vector<8x128xf32>
    %250 = math.exp %249 : vector<8x128xf32>
    %cst_76 = arith.constant 1.000000e+00 : f32
    %251 = vector.broadcast %cst_76 : f32 to vector<8x128xf32>
    %252 = arith.addf %251, %250 : vector<8x128xf32>
    %253 = arith.divf %251, %252 : vector<8x128xf32>
    %254 = arith.mulf %245, %225 : vector<8x128xf32>
    %255 = arith.mulf %239, %247 : vector<8x128xf32>
    %256 = arith.addf %254, %255 : vector<8x128xf32>
    %257 = math.tanh %256 : vector<8x128xf32>
    %258 = arith.mulf %253, %257 : vector<8x128xf32>
    %c0_77 = arith.constant 0 : index
    %c56_78 = arith.constant 56 : index
    %c0_79 = arith.constant 0 : index
    %259 = vector.load %arg6[%c0_77, %c56_78, %c0_79] : memref<1x64x128xf32, #tpu.memory_space<vmem>>, vector<1x8x128xf32>
    %260 = vector.shape_cast %259 : vector<1x8x128xf32> to vector<8x128xf32>
    %261 = vector.shape_cast %258 : vector<8x128xf32> to vector<1x8x128xf32>
    tpu.vector_store %arg6[%c0_77, %c56_78, %c0_79], %261 {strides = array<i32>} : memref<1x64x128xf32, #tpu.memory_space<vmem>>, vector<1x8x128xf32>,
    %c0_80 = arith.constant 0 : index
    %c0_81 = arith.constant 0 : index
    %262 = vector.load %arg11[%c0_80, %c0_81] : memref<8x128xf32, #tpu.memory_space<vmem>>, vector<8x128xf32>
    tpu.vector_store %arg11[%c0_80, %c0_81], %258 {strides = array<i32>} : memref<8x128xf32, #tpu.memory_space<vmem>>, vector<8x128xf32>,
    %c0_82 = arith.constant 0 : index
    %c0_83 = arith.constant 0 : index
    %263 = vector.load %arg12[%c0_82, %c0_83] : memref<8x128xf32, #tpu.memory_space<vmem>>, vector<8x128xf32>
    tpu.vector_store %arg12[%c0_82, %c0_83], %256 {strides = array<i32>} : memref<8x128xf32, #tpu.memory_space<vmem>>, vector<8x128xf32>,
    return
  }
  func.func @transform_0(%arg0: i32, %arg1: i32) -> (i32, i32, i32) {
    %c0_i32 = arith.constant 0 : i32
    %c0_i32_0 = arith.constant 0 : i32
    return %arg0, %arg1, %c0_i32 : i32, i32, i32
  }
  func.func @transform_4(%arg0: i32, %arg1: i32) -> (i32, i32, i32) {
    %c0_i32 = arith.constant 0 : i32
    %c0_i32_0 = arith.constant 0 : i32
    return %arg0, %arg1, %c0_i32 : i32, i32, i32
  }
}

</mosaic_0001>

<llo_original>
// kernel: lstm_bc_intp_forward.1
$region0: #{lstm_bc_intp_forward.1}
  #allocation0 [shape = 'u32[]', space=smem, size = 0x4, offset = 0x4, fixed_abs, tag = 'smem constant byte address 0x4 - core index']
  #allocation1 [shape = 'u32[72,128]{1,0:T(1,128)}', space=vmem, size = 0x9000, scoped, tag = 'internal scratch']
  #allocation2 [shape = 'f32[128,512]{1,0:T(8,128)}', space=vmem, size = 0x40000, scoped, tag = 'scratch operand']
  #allocation3 [shape = 'f32[128,512]{1,0:T(8,128)}', space=vmem, size = 0x40000, scoped, tag = 'scratch operand']
  #allocation4 [shape = 'f32[1,512]{1,0:T(1,128)}', space=vmem, size = 0x800, scoped, tag = 'scratch operand']
  #allocation5 [shape = 'f32[64,512]{1,0:T(8,128)}', space=vmem, size = 0x20000, scoped, tag = 'scratch operand']
  #allocation6 [shape = 'f32[8,128]{1,0:T(8,128)}', space=vmem, size = 0x1000, scoped, tag = 'scratch operand']
  #allocation7 [shape = 'f32[8,128]{1,0:T(8,128)}', space=vmem, size = 0x1000, scoped, tag = 'scratch operand']
  #allocation9 [shape = 's32[]', space=sflag, size = 0x4, offset = 0, fixed_abs, tag = 'sflag constant byte address 0x0 - dummy sync flag']
  #allocation11 [shape = 's32[]', space=sflag, size = 0x4, offset = 0, fixed_abs, tag = 'sflag constant byte address 0x0 - dummy sync flag']
  #allocation13 [shape = 's32[]', space=sflag, size = 0x4, offset = 0, fixed_abs, tag = 'sflag constant byte address 0x0 - dummy sync flag']
  %s0 = inlined_call_operand.vmem [shape: f32[1,64,128], index: 0, kind: input, shape index: {}]
  %s1 = inlined_call_operand.vmem [shape: f32[128,512], index: 1, kind: input, shape index: {}]
  %s2 = inlined_call_operand.vmem [shape: f32[128,512], index: 2, kind: input, shape index: {}]
  %s3 = inlined_call_operand.vmem [shape: f32[1,512], index: 3, kind: input, shape index: {}]
  %s4 = inlined_call_operand.vmem [shape: f32[1,64,128], index: 4, kind: output, shape index: {}]
  %s5 = sld [smem:[#allocation0]]
  $region89: #{lstm_bc_intp_forward.1} parent=0
    _
  %s7 = ssub.s32 1, %s5
  %s8 = scalar_select 0, %s7, %s5
  // Predicated region
  $region2: #{lstm_bc_intp_forward.1} parent=0 // pred_check
    _
  $region3: #{lstm_bc_intp_forward.1} parent=0 // pred_check_branch
    %10 = sbr.rel (0) target = $region5
  $region4: #{lstm_bc_intp_forward.1} parent=0 // pred_region
    _
  $region5: #{lstm_bc_intp_forward.1} parent=0 // pred_fallthru
    _
  %p11 = scmp.eq.s32.totalorder 0, 0
  // Predicated region
  $region6: #{lstm_bc_intp_forward.1} parent=0 // pred_check
    %p12 = pneg %p11
  $region7: #{lstm_bc_intp_forward.1} parent=0 // pred_check_branch
    %14 = sbr.rel (%p12) target = $region9
  $region8: #{lstm_bc_intp_forward.1} parent=0 // pred_region
    $region10: #{lstm_bc_intp_forward.1} parent=8
      #allocation8 [shape = 's32[1]{0}', space=sflag, size = 0x4, scoped, tag = 'scoped memory for lstm_bc_intp_forward.1']
      // Predicated region
      $region11: #{lstm_bc_intp_forward.1} parent=10 // pred_check
        _
      $region12: #{lstm_bc_intp_forward.1} parent=10 // pred_check_branch
        %16 = sbr.rel (0) target = $region14
      $region13: #{lstm_bc_intp_forward.1} parent=10 // pred_region
        loop: start=0, step=1, limit=1
        $region15: #{lstm_bc_intp_forward.1} parent=13 // loop_pre_header
          _
        $region16: #{lstm_bc_intp_forward.1} parent=13 // loop_header
          %s18 = sphi 0, %s22
          %p19 = scmp.ge.s32.totalorder %s18, 1
          %s23 = sphi %s1, %s1
          %s24 = sphi [#allocation2], [#allocation2]
        $region17: #{lstm_bc_intp_forward.1} parent=13 // loop_header_branch
          %21 = sbr.rel (%p19) target = $region21
        $region18: #{lstm_bc_intp_forward.1} parent=13 // loop_body
          %v25 = vld [vmem:[%s23] sm:$0xff]
          %26 = vst [vmem:[%s24] sm:$0xff] %v25
          %v27 = vld [vmem:[%s23 + $0x8] sm:$0xff]
          %28 = vst [vmem:[%s24 + $0x8] sm:$0xff] %v27
          %v29 = vld [vmem:[%s23 + $0x10] sm:$0xff]
          %30 = vst [vmem:[%s24 + $0x10] sm:$0xff] %v29
          %v31 = vld [vmem:[%s23 + $0x18] sm:$0xff]
          %32 = vst [vmem:[%s24 + $0x18] sm:$0xff] %v31
          %v33 = vld [vmem:[%s23 + $0x20] sm:$0xff]
          %34 = vst [vmem:[%s24 + $0x20] sm:$0xff] %v33
          %v35 = vld [vmem:[%s23 + $0x28] sm:$0xff]
          %36 = vst [vmem:[%s24 + $0x28] sm:$0xff] %v35
          %v37 = vld [vmem:[%s23 + $0x30] sm:$0xff]
          %38 = vst [vmem:[%s24 + $0x30] sm:$0xff] %v37
          %v39 = vld [vmem:[%s23 + $0x38] sm:$0xff]
          %40 = vst [vmem:[%s24 + $0x38] sm:$0xff] %v39
          %v41 = vld [vmem:[%s23 + $0x40] sm:$0xff]
          %42 = vst [vmem:[%s24 + $0x40] sm:$0xff] %v41
          %v43 = vld [vmem:[%s23 + $0x48] sm:$0xff]
          %44 = vst [vmem:[%s24 + $0x48] sm:$0xff] %v43
          %v45 = vld [vmem:[%s23 + $0x50] sm:$0xff]
          %46 = vst [vmem:[%s24 + $0x50] sm:$0xff] %v45
          %v47 = vld [vmem:[%s23 + $0x58] sm:$0xff]
          %48 = vst [vmem:[%s24 + $0x58] sm:$0xff] %v47
          %v49 = vld [vmem:[%s23 + $0x60] sm:$0xff]
          %50 = vst [vmem:[%s24 + $0x60] sm:$0xff] %v49
          %v51 = vld [vmem:[%s23 + $0x68] sm:$0xff]
          %52 = vst [vmem:[%s24 + $0x68] sm:$0xff] %v51
          %v53 = vld [vmem:[%s23 + $0x70] sm:$0xff]
          %54 = vst [vmem:[%s24 + $0x70] sm:$0xff] %v53
          %v55 = vld [vmem:[%s23 + $0x78] sm:$0xff]
          %56 = vst [vmem:[%s24 + $0x78] sm:$0xff] %v55
          %v57 = vld [vmem:[%s23 + $0x80] sm:$0xff]
          %58 = vst [vmem:[%s24 + $0x80] sm:$0xff] %v57
          %v59 = vld [vmem:[%s23 + $0x88] sm:$0xff]
          %60 = vst [vmem:[%s24 + $0x88] sm:$0xff] %v59
          %v61 = vld [vmem:[%s23 + $0x90] sm:$0xff]
          %62 = vst [vmem:[%s24 + $0x90] sm:$0xff] %v61
          %v63 = vld [vmem:[%s23 + $0x98] sm:$0xff]
          %64 = vst [vmem:[%s24 + $0x98] sm:$0xff] %v63
          %v65 = vld [vmem:[%s23 + $0xa0] sm:$0xff]
          %66 = vst [vmem:[%s24 + $0xa0] sm:$0xff] %v65
          %v67 = vld [vmem:[%s23 + $0xa8] sm:$0xff]
          %68 = vst [vmem:[%s24 + $0xa8] sm:$0xff] %v67
          %v69 = vld [vmem:[%s23 + $0xb0] sm:$0xff]
          %70 = vst [vmem:[%s24 + $0xb0] sm:$0xff] %v69
          %v71 = vld [vmem:[%s23 + $0xb8] sm:$0xff]
          %72 = vst [vmem:[%s24 + $0xb8] sm:$0xff] %v71
          %v73 = vld [vmem:[%s23 + $0xc0] sm:$0xff]
          %74 = vst [vmem:[%s24 + $0xc0] sm:$0xff] %v73
          %v75 = vld [vmem:[%s23 + $0xc8] sm:$0xff]
          %76 = vst [vmem:[%s24 + $0xc8] sm:$0xff] %v75
          %v77 = vld [vmem:[%s23 + $0xd0] sm:$0xff]
          %78 = vst [vmem:[%s24 + $0xd0] sm:$0xff] %v77
          %v79 = vld [vmem:[%s23 + $0xd8] sm:$0xff]
          %80 = vst [vmem:[%s24 + $0xd8] sm:$0xff] %v79
          %v81 = vld [vmem:[%s23 + $0xe0] sm:$0xff]
          %82 = vst [vmem:[%s24 + $0xe0] sm:$0xff] %v81
          %v83 = vld [vmem:[%s23 + $0xe8] sm:$0xff]
          %84 = vst [vmem:[%s24 + $0xe8] sm:$0xff] %v83
          %v85 = vld [vmem:[%s23 + $0xf0] sm:$0xff]
          %86 = vst [vmem:[%s24 + $0xf0] sm:$0xff] %v85
          %v87 = vld [vmem:[%s23 + $0xf8] sm:$0xff]
          %88 = vst [vmem:[%s24 + $0xf8] sm:$0xff] %v87
          %v89 = vld [vmem:[%s23 + $0x100] sm:$0xff]
          %90 = vst [vmem:[%s24 + $0x100] sm:$0xff] %v89
          %v91 = vld [vmem:[%s23 + $0x108] sm:$0xff]
          %92 = vst [vmem:[%s24 + $0x108] sm:$0xff] %v91
          %v93 = vld [vmem:[%s23 + $0x110] sm:$0xff]
          %94 = vst [vmem:[%s24 + $0x110] sm:$0xff] %v93
          %v95 = vld [vmem:[%s23 + $0x118] sm:$0xff]
          %96 = vst [vmem:[%s24 + $0x118] sm:$0xff] %v95
          %v97 = vld [vmem:[%s23 + $0x120] sm:$0xff]
          %98 = vst [vmem:[%s24 + $0x120] sm:$0xff] %v97
          %v99 = vld [vmem:[%s23 + $0x128] sm:$0xff]
          %100 = vst [vmem:[%s24 + $0x128] sm:$0xff] %v99
          %v101 = vld [vmem:[%s23 + $0x130] sm:$0xff]
          %102 = vst [vmem:[%s24 + $0x130] sm:$0xff] %v101
          %v103 = vld [vmem:[%s23 + $0x138] sm:$0xff]
          %104 = vst [vmem:[%s24 + $0x138] sm:$0xff] %v103
          %v105 = vld [vmem:[%s23 + $0x140] sm:$0xff]
          %106 = vst [vmem:[%s24 + $0x140] sm:$0xff] %v105
          %v107 = vld [vmem:[%s23 + $0x148] sm:$0xff]
          %108 = vst [vmem:[%s24 + $0x148] sm:$0xff] %v107
          %v109 = vld [vmem:[%s23 + $0x150] sm:$0xff]
          %110 = vst [vmem:[%s24 + $0x150] sm:$0xff] %v109
          %v111 = vld [vmem:[%s23 + $0x158] sm:$0xff]
          %112 = vst [vmem:[%s24 + $0x158] sm:$0xff] %v111
          %v113 = vld [vmem:[%s23 + $0x160] sm:$0xff]
          %114 = vst [vmem:[%s24 + $0x160] sm:$0xff] %v113
          %v115 = vld [vmem:[%s23 + $0x168] sm:$0xff]
          %116 = vst [vmem:[%s24 + $0x168] sm:$0xff] %v115
          %v117 = vld [vmem:[%s23 + $0x170] sm:$0xff]
          %118 = vst [vmem:[%s24 + $0x170] sm:$0xff] %v117
          %v119 = vld [vmem:[%s23 + $0x178] sm:$0xff]
          %120 = vst [vmem:[%s24 + $0x178] sm:$0xff] %v119
          %v121 = vld [vmem:[%s23 + $0x180] sm:$0xff]
          %122 = vst [vmem:[%s24 + $0x180] sm:$0xff] %v121
          %v123 = vld [vmem:[%s23 + $0x188] sm:$0xff]
          %124 = vst [vmem:[%s24 + $0x188] sm:$0xff] %v123
          %v125 = vld [vmem:[%s23 + $0x190] sm:$0xff]
          %126 = vst [vmem:[%s24 + $0x190] sm:$0xff] %v125
          %v127 = vld [vmem:[%s23 + $0x198] sm:$0xff]
          %128 = vst [vmem:[%s24 + $0x198] sm:$0xff] %v127
          %v129 = vld [vmem:[%s23 + $0x1a0] sm:$0xff]
          %130 = vst [vmem:[%s24 + $0x1a0] sm:$0xff] %v129
          %v131 = vld [vmem:[%s23 + $0x1a8] sm:$0xff]
          %132 = vst [vmem:[%s24 + $0x1a8] sm:$0xff] %v131
          %v133 = vld [vmem:[%s23 + $0x1b0] sm:$0xff]
          %134 = vst [vmem:[%s24 + $0x1b0] sm:$0xff] %v133
          %v135 = vld [vmem:[%s23 + $0x1b8] sm:$0xff]
          %136 = vst [vmem:[%s24 + $0x1b8] sm:$0xff] %v135
          %v137 = vld [vmem:[%s23 + $0x1c0] sm:$0xff]
          %138 = vst [vmem:[%s24 + $0x1c0] sm:$0xff] %v137
          %v139 = vld [vmem:[%s23 + $0x1c8] sm:$0xff]
          %140 = vst [vmem:[%s24 + $0x1c8] sm:$0xff] %v139
          %v141 = vld [vmem:[%s23 + $0x1d0] sm:$0xff]
          %142 = vst [vmem:[%s24 + $0x1d0] sm:$0xff] %v141
          %v143 = vld [vmem:[%s23 + $0x1d8] sm:$0xff]
          %144 = vst [vmem:[%s24 + $0x1d8] sm:$0xff] %v143
          %v145 = vld [vmem:[%s23 + $0x1e0] sm:$0xff]
          %146 = vst [vmem:[%s24 + $0x1e0] sm:$0xff] %v145
          %v147 = vld [vmem:[%s23 + $0x1e8] sm:$0xff]
          %148 = vst [vmem:[%s24 + $0x1e8] sm:$0xff] %v147
          %v149 = vld [vmem:[%s23 + $0x1f0] sm:$0xff]
          %150 = vst [vmem:[%s24 + $0x1f0] sm:$0xff] %v149
          %v151 = vld [vmem:[%s23 + $0x1f8] sm:$0xff]
          %152 = vst [vmem:[%s24 + $0x1f8] sm:$0xff] %v151
        $region19: #{lstm_bc_intp_forward.1} parent=13 // loop_footer
          %s22 = sadd.s32 1, %s18
        $region20: #{lstm_bc_intp_forward.1} parent=13 // loop_footer_branch
          %17 = sbr.rel target = $region16
        $region21: #{lstm_bc_intp_forward.1} parent=13 // loop_exit
          _
      $region14: #{lstm_bc_intp_forward.1} parent=10 // pred_fallthru
        _
      // Predicated region
      $region22: #{lstm_bc_intp_forward.1} parent=10 // pred_check
        _
      $region23: #{lstm_bc_intp_forward.1} parent=10 // pred_check_branch
        %154 = sbr.rel target = $region25
      $region24: #{lstm_bc_intp_forward.1} parent=10 // pred_region
        _
      $region25: #{lstm_bc_intp_forward.1} parent=10 // pred_fallthru
        _
      // Predicated region
      $region26: #{lstm_bc_intp_forward.1} parent=10 // pred_check
        _
      $region27: #{lstm_bc_intp_forward.1} parent=10 // pred_check_branch
        %157 = sbr.rel (0) target = $region29
      $region28: #{lstm_bc_intp_forward.1} parent=10 // pred_region
        %158 = vsyncadd [#allocation8], 8192
      $region29: #{lstm_bc_intp_forward.1} parent=10 // pred_fallthru
        _
      %s159 = smul.u32 8, 16
      %s160 = smul.u32 %s159, 4
      %s161 = sshll.u32 %s160, 4
      %162 = dma.done [#allocation8], %s161
    $region30: #{lstm_bc_intp_forward.1} parent=8
      #allocation10 [shape = 's32[1]{0}', space=sflag, size = 0x4, scoped, tag = 'scoped memory for lstm_bc_intp_forward.1']
      // Predicated region
      $region31: #{lstm_bc_intp_forward.1} parent=30 // pred_check
        _
      $region32: #{lstm_bc_intp_forward.1} parent=30 // pred_check_branch
        %164 = sbr.rel (0) target = $region34
      $region33: #{lstm_bc_intp_forward.1} parent=30 // pred_region
        loop: start=0, step=1, limit=1
        $region35: #{lstm_bc_intp_forward.1} parent=33 // loop_pre_header
          _
        $region36: #{lstm_bc_intp_forward.1} parent=33 // loop_header
          %s166 = sphi 0, %s170
          %p167 = scmp.ge.s32.totalorder %s166, 1
          %s171 = sphi %s2, %s2
          %s172 = sphi [#allocation3], [#allocation3]
        $region37: #{lstm_bc_intp_forward.1} parent=33 // loop_header_branch
          %169 = sbr.rel (%p167) target = $region41
        $region38: #{lstm_bc_intp_forward.1} parent=33 // loop_body
          %v173 = vld [vmem:[%s171] sm:$0xff]
          %174 = vst [vmem:[%s172] sm:$0xff] %v173
          %v175 = vld [vmem:[%s171 + $0x8] sm:$0xff]
          %176 = vst [vmem:[%s172 + $0x8] sm:$0xff] %v175
          %v177 = vld [vmem:[%s171 + $0x10] sm:$0xff]
          %178 = vst [vmem:[%s172 + $0x10] sm:$0xff] %v177
          %v179 = vld [vmem:[%s171 + $0x18] sm:$0xff]
          %180 = vst [vmem:[%s172 + $0x18] sm:$0xff] %v179
          %v181 = vld [vmem:[%s171 + $0x20] sm:$0xff]
          %182 = vst [vmem:[%s172 + $0x20] sm:$0xff] %v181
          %v183 = vld [vmem:[%s171 + $0x28] sm:$0xff]
          %184 = vst [vmem:[%s172 + $0x28] sm:$0xff] %v183
          %v185 = vld [vmem:[%s171 + $0x30] sm:$0xff]
          %186 = vst [vmem:[%s172 + $0x30] sm:$0xff] %v185
          %v187 = vld [vmem:[%s171 + $0x38] sm:$0xff]
          %188 = vst [vmem:[%s172 + $0x38] sm:$0xff] %v187
          %v189 = vld [vmem:[%s171 + $0x40] sm:$0xff]
          %190 = vst [vmem:[%s172 + $0x40] sm:$0xff] %v189
          %v191 = vld [vmem:[%s171 + $0x48] sm:$0xff]
          %192 = vst [vmem:[%s172 + $0x48] sm:$0xff] %v191
          %v193 = vld [vmem:[%s171 + $0x50] sm:$0xff]
          %194 = vst [vmem:[%s172 + $0x50] sm:$0xff] %v193
          %v195 = vld [vmem:[%s171 + $0x58] sm:$0xff]
          %196 = vst [vmem:[%s172 + $0x58] sm:$0xff] %v195
          %v197 = vld [vmem:[%s171 + $0x60] sm:$0xff]
          %198 = vst [vmem:[%s172 + $0x60] sm:$0xff] %v197
          %v199 = vld [vmem:[%s171 + $0x68] sm:$0xff]
          %200 = vst [vmem:[%s172 + $0x68] sm:$0xff] %v199
          %v201 = vld [vmem:[%s171 + $0x70] sm:$0xff]
          %202 = vst [vmem:[%s172 + $0x70] sm:$0xff] %v201
          %v203 = vld [vmem:[%s171 + $0x78] sm:$0xff]
          %204 = vst [vmem:[%s172 + $0x78] sm:$0xff] %v203
          %v205 = vld [vmem:[%s171 + $0x80] sm:$0xff]
          %206 = vst [vmem:[%s172 + $0x80] sm:$0xff] %v205
          %v207 = vld [vmem:[%s171 + $0x88] sm:$0xff]
          %208 = vst [vmem:[%s172 + $0x88] sm:$0xff] %v207
          %v209 = vld [vmem:[%s171 + $0x90] sm:$0xff]
          %210 = vst [vmem:[%s172 + $0x90] sm:$0xff] %v209
          %v211 = vld [vmem:[%s171 + $0x98] sm:$0xff]
          %212 = vst [vmem:[%s172 + $0x98] sm:$0xff] %v211
          %v213 = vld [vmem:[%s171 + $0xa0] sm:$0xff]
          %214 = vst [vmem:[%s172 + $0xa0] sm:$0xff] %v213
          %v215 = vld [vmem:[%s171 + $0xa8] sm:$0xff]
          %216 = vst [vmem:[%s172 + $0xa8] sm:$0xff] %v215
          %v217 = vld [vmem:[%s171 + $0xb0] sm:$0xff]
          %218 = vst [vmem:[%s172 + $0xb0] sm:$0xff] %v217
          %v219 = vld [vmem:[%s171 + $0xb8] sm:$0xff]
          %220 = vst [vmem:[%s172 + $0xb8] sm:$0xff] %v219
          %v221 = vld [vmem:[%s171 + $0xc0] sm:$0xff]
          %222 = vst [vmem:[%s172 + $0xc0] sm:$0xff] %v221
          %v223 = vld [vmem:[%s171 + $0xc8] sm:$0xff]
          %224 = vst [vmem:[%s172 + $0xc8] sm:$0xff] %v223
          %v225 = vld [vmem:[%s171 + $0xd0] sm:$0xff]
          %226 = vst [vmem:[%s172 + $0xd0] sm:$0xff] %v225
          %v227 = vld [vmem:[%s171 + $0xd8] sm:$0xff]
          %228 = vst [vmem:[%s172 + $0xd8] sm:$0xff] %v227
          %v229 = vld [vmem:[%s171 + $0xe0] sm:$0xff]
          %230 = vst [vmem:[%s172 + $0xe0] sm:$0xff] %v229
          %v231 = vld [vmem:[%s171 + $0xe8] sm:$0xff]
          %232 = vst [vmem:[%s172 + $0xe8] sm:$0xff] %v231
          %v233 = vld [vmem:[%s171 + $0xf0] sm:$0xff]
          %234 = vst [vmem:[%s172 + $0xf0] sm:$0xff] %v233
          %v235 = vld [vmem:[%s171 + $0xf8] sm:$0xff]
          %236 = vst [vmem:[%s172 + $0xf8] sm:$0xff] %v235
          %v237 = vld [vmem:[%s171 + $0x100] sm:$0xff]
          %238 = vst [vmem:[%s172 + $0x100] sm:$0xff] %v237
          %v239 = vld [vmem:[%s171 + $0x108] sm:$0xff]
          %240 = vst [vmem:[%s172 + $0x108] sm:$0xff] %v239
          %v241 = vld [vmem:[%s171 + $0x110] sm:$0xff]
          %242 = vst [vmem:[%s172 + $0x110] sm:$0xff] %v241
          %v243 = vld [vmem:[%s171 + $0x118] sm:$0xff]
          %244 = vst [vmem:[%s172 + $0x118] sm:$0xff] %v243
          %v245 = vld [vmem:[%s171 + $0x120] sm:$0xff]
          %246 = vst [vmem:[%s172 + $0x120] sm:$0xff] %v245
          %v247 = vld [vmem:[%s171 + $0x128] sm:$0xff]
          %248 = vst [vmem:[%s172 + $0x128] sm:$0xff] %v247
          %v249 = vld [vmem:[%s171 + $0x130] sm:$0xff]
          %250 = vst [vmem:[%s172 + $0x130] sm:$0xff] %v249
          %v251 = vld [vmem:[%s171 + $0x138] sm:$0xff]
          %252 = vst [vmem:[%s172 + $0x138] sm:$0xff] %v251
          %v253 = vld [vmem:[%s171 + $0x140] sm:$0xff]
          %254 = vst [vmem:[%s172 + $0x140] sm:$0xff] %v253
          %v255 = vld [vmem:[%s171 + $0x148] sm:$0xff]
          %256 = vst [vmem:[%s172 + $0x148] sm:$0xff] %v255
          %v257 = vld [vmem:[%s171 + $0x150] sm:$0xff]
          %258 = vst [vmem:[%s172 + $0x150] sm:$0xff] %v257
          %v259 = vld [vmem:[%s171 + $0x158] sm:$0xff]
          %260 = vst [vmem:[%s172 + $0x158] sm:$0xff] %v259
          %v261 = vld [vmem:[%s171 + $0x160] sm:$0xff]
          %262 = vst [vmem:[%s172 + $0x160] sm:$0xff] %v261
          %v263 = vld [vmem:[%s171 + $0x168] sm:$0xff]
          %264 = vst [vmem:[%s172 + $0x168] sm:$0xff] %v263
          %v265 = vld [vmem:[%s171 + $0x170] sm:$0xff]
          %266 = vst [vmem:[%s172 + $0x170] sm:$0xff] %v265
          %v267 = vld [vmem:[%s171 + $0x178] sm:$0xff]
          %268 = vst [vmem:[%s172 + $0x178] sm:$0xff] %v267
          %v269 = vld [vmem:[%s171 + $0x180] sm:$0xff]
          %270 = vst [vmem:[%s172 + $0x180] sm:$0xff] %v269
          %v271 = vld [vmem:[%s171 + $0x188] sm:$0xff]
          %272 = vst [vmem:[%s172 + $0x188] sm:$0xff] %v271
          %v273 = vld [vmem:[%s171 + $0x190] sm:$0xff]
          %274 = vst [vmem:[%s172 + $0x190] sm:$0xff] %v273
          %v275 = vld [vmem:[%s171 + $0x198] sm:$0xff]
          %276 = vst [vmem:[%s172 + $0x198] sm:$0xff] %v275
          %v277 = vld [vmem:[%s171 + $0x1a0] sm:$0xff]
          %278 = vst [vmem:[%s172 + $0x1a0] sm:$0xff] %v277
          %v279 = vld [vmem:[%s171 + $0x1a8] sm:$0xff]
          %280 = vst [vmem:[%s172 + $0x1a8] sm:$0xff] %v279
          %v281 = vld [vmem:[%s171 + $0x1b0] sm:$0xff]
          %282 = vst [vmem:[%s172 + $0x1b0] sm:$0xff] %v281
          %v283 = vld [vmem:[%s171 + $0x1b8] sm:$0xff]
          %284 = vst [vmem:[%s172 + $0x1b8] sm:$0xff] %v283
          %v285 = vld [vmem:[%s171 + $0x1c0] sm:$0xff]
          %286 = vst [vmem:[%s172 + $0x1c0] sm:$0xff] %v285
          %v287 = vld [vmem:[%s171 + $0x1c8] sm:$0xff]
          %288 = vst [vmem:[%s172 + $0x1c8] sm:$0xff] %v287
          %v289 = vld [vmem:[%s171 + $0x1d0] sm:$0xff]
          %290 = vst [vmem:[%s172 + $0x1d0] sm:$0xff] %v289
          %v291 = vld [vmem:[%s171 + $0x1d8] sm:$0xff]
          %292 = vst [vmem:[%s172 + $0x1d8] sm:$0xff] %v291
          %v293 = vld [vmem:[%s171 + $0x1e0] sm:$0xff]
          %294 = vst [vmem:[%s172 + $0x1e0] sm:$0xff] %v293
          %v295 = vld [vmem:[%s171 + $0x1e8] sm:$0xff]
          %296 = vst [vmem:[%s172 + $0x1e8] sm:$0xff] %v295
          %v297 = vld [vmem:[%s171 + $0x1f0] sm:$0xff]
          %298 = vst [vmem:[%s172 + $0x1f0] sm:$0xff] %v297
          %v299 = vld [vmem:[%s171 + $0x1f8] sm:$0xff]
          %300 = vst [vmem:[%s172 + $0x1f8] sm:$0xff] %v299
        $region39: #{lstm_bc_intp_forward.1} parent=33 // loop_footer
          %s170 = sadd.s32 1, %s166
        $region40: #{lstm_bc_intp_forward.1} parent=33 // loop_footer_branch
          %165 = sbr.rel target = $region36
        $region41: #{lstm_bc_intp_forward.1} parent=33 // loop_exit
          _
      $region34: #{lstm_bc_intp_forward.1} parent=30 // pred_fallthru
        _
      // Predicated region
      $region42: #{lstm_bc_intp_forward.1} parent=30 // pred_check
        _
      $region43: #{lstm_bc_intp_forward.1} parent=30 // pred_check_branch
        %302 = sbr.rel target = $region45
      $region44: #{lstm_bc_intp_forward.1} parent=30 // pred_region
        _
      $region45: #{lstm_bc_intp_forward.1} parent=30 // pred_fallthru
        _
      // Predicated region
      $region46: #{lstm_bc_intp_forward.1} parent=30 // pred_check
        _
      $region47: #{lstm_bc_intp_forward.1} parent=30 // pred_check_branch
        %305 = sbr.rel (0) target = $region49
      $region48: #{lstm_bc_intp_forward.1} parent=30 // pred_region
        %306 = vsyncadd [#allocation10], 8192
      $region49: #{lstm_bc_intp_forward.1} parent=30 // pred_fallthru
        _
      %s307 = smul.u32 8, 16
      %s308 = smul.u32 %s307, 4
      %s309 = sshll.u32 %s308, 4
      %310 = dma.done [#allocation10], %s309
    $region50: #{lstm_bc_intp_forward.1} parent=8
      #allocation12 [shape = 's32[1]{0}', space=sflag, size = 0x4, scoped, tag = 'scoped memory for lstm_bc_intp_forward.1']
      // Predicated region
      $region51: #{lstm_bc_intp_forward.1} parent=50 // pred_check
        _
      $region52: #{lstm_bc_intp_forward.1} parent=50 // pred_check_branch
        %312 = sbr.rel target = $region54
      $region53: #{lstm_bc_intp_forward.1} parent=50 // pred_region
        // Predicated region
        $region66: #{lstm_bc_intp_forward.1} parent=53 // pred_check
          _
        $region67: #{lstm_bc_intp_forward.1} parent=53 // pred_check_branch
          %328 = sbr.rel (0) target = $region69
        $region68: #{lstm_bc_intp_forward.1} parent=53 // pred_region
          %s330 = ssub.s32 16, 1
          loop: start=0, step=1, limit=1
          $region70: #{lstm_bc_intp_forward.1} parent=68 // loop_pre_header
            _
          $region71: #{lstm_bc_intp_forward.1} parent=68 // loop_header
            %s332 = sphi 0, %s336
            %p333 = scmp.ge.s32.totalorder %s332, 1
            %s337 = sphi %s3, %s3
            %s338 = sphi [#allocation4], [#allocation4]
          $region72: #{lstm_bc_intp_forward.1} parent=68 // loop_header_branch
            %335 = sbr.rel (%p333) target = $region76
          $region73: #{lstm_bc_intp_forward.1} parent=68 // loop_body
            %v339 = vld [vmem:[%s337] sm:%s330]
            %340 = vst [vmem:[%s338] sm:%s330] %v339
          $region74: #{lstm_bc_intp_forward.1} parent=68 // loop_footer
            %s336 = sadd.s32 1, %s332
          $region75: #{lstm_bc_intp_forward.1} parent=68 // loop_footer_branch
            %331 = sbr.rel target = $region71
          $region76: #{lstm_bc_intp_forward.1} parent=68 // loop_exit
            _
        $region69: #{lstm_bc_intp_forward.1} parent=53 // pred_fallthru
          _
      $region54: #{lstm_bc_intp_forward.1} parent=50 // pred_fallthru
        _
      // Predicated region
      $region55: #{lstm_bc_intp_forward.1} parent=50 // pred_check
        _
      $region56: #{lstm_bc_intp_forward.1} parent=50 // pred_check_branch
        %314 = sbr.rel (0) target = $region58
      $region57: #{lstm_bc_intp_forward.1} parent=50 // pred_region
        %s316 = ssub.s32 16, 1
        loop: start=0, step=1, limit=1
        $region59: #{lstm_bc_intp_forward.1} parent=57 // loop_pre_header
          _
        $region60: #{lstm_bc_intp_forward.1} parent=57 // loop_header
          %s318 = sphi 0, %s322
          %p319 = scmp.ge.s32.totalorder %s318, 1
          %s323 = sphi %s3, %s3
          %s324 = sphi [#allocation4], [#allocation4]
        $region61: #{lstm_bc_intp_forward.1} parent=57 // loop_header_branch
          %321 = sbr.rel (%p319) target = $region65
        $region62: #{lstm_bc_intp_forward.1} parent=57 // loop_body
          %v325 = vld [vmem:[%s323] sm:%s316]
          %326 = vst [vmem:[%s324] sm:%s316] %v325
        $region63: #{lstm_bc_intp_forward.1} parent=57 // loop_footer
          %s322 = sadd.s32 1, %s318
        $region64: #{lstm_bc_intp_forward.1} parent=57 // loop_footer_branch
          %317 = sbr.rel target = $region60
        $region65: #{lstm_bc_intp_forward.1} parent=57 // loop_exit
          _
      $region58: #{lstm_bc_intp_forward.1} parent=50 // pred_fallthru
        _
      // Predicated region
      $region77: #{lstm_bc_intp_forward.1} parent=50 // pred_check
        _
      $region78: #{lstm_bc_intp_forward.1} parent=50 // pred_check_branch
        %343 = sbr.rel (0) target = $region80
      $region79: #{lstm_bc_intp_forward.1} parent=50 // pred_region
        %344 = vsyncadd [#allocation12], 64
      $region80: #{lstm_bc_intp_forward.1} parent=50 // pred_fallthru
        _
      %s345 = smul.u32 1, 4
      %s346 = sshll.u32 %s345, 4
      %347 = dma.done [#allocation12], %s346
    %348 = vst [vmem:[#allocation6] sm:$0xff] 0.0
    %349 = vst [vmem:[#allocation7] sm:$0xff] 0.0
  $region9: #{lstm_bc_intp_forward.1} parent=0 // pred_fallthru
    _
  %v350 = vld [vmem:[%s0] sm:$0xff]
  %v351 = vld [vmem:[%s0 + $0x8] sm:$0xff]
  %v352 = vld [vmem:[%s0 + $0x10] sm:$0xff]
  %v353 = vld [vmem:[%s0 + $0x18] sm:$0xff]
  %v354 = vld [vmem:[%s0 + $0x20] sm:$0xff]
  %v355 = vld [vmem:[%s0 + $0x28] sm:$0xff]
  %v356 = vld [vmem:[%s0 + $0x30] sm:$0xff]
  %v357 = vld [vmem:[%s0 + $0x38] sm:$0xff]
  %v358 = vld [vmem:[#allocation2] sm:$0xff]
  %v359 = vld [vmem:[#allocation2 + $0x8] sm:$0xff]
  %v360 = vld [vmem:[#allocation2 + $0x10] sm:$0xff]
  %v361 = vld [vmem:[#allocation2 + $0x18] sm:$0xff]
  %v362 = vld [vmem:[#allocation2 + $0x20] sm:$0xff]
  %v363 = vld [vmem:[#allocation2 + $0x28] sm:$0xff]
  %v364 = vld [vmem:[#allocation2 + $0x30] sm:$0xff]
  %v365 = vld [vmem:[#allocation2 + $0x38] sm:$0xff]
  %v366 = vld [vmem:[#allocation2 + $0x40] sm:$0xff]
  %v367 = vld [vmem:[#allocation2 + $0x48] sm:$0xff]
  %v368 = vld [vmem:[#allocation2 + $0x50] sm:$0xff]
  %v369 = vld [vmem:[#allocation2 + $0x58] sm:$0xff]
  %v370 = vld [vmem:[#allocation2 + $0x60] sm:$0xff]
  %v371 = vld [vmem:[#allocation2 + $0x68] sm:$0xff]
  %v372 = vld [vmem:[#allocation2 + $0x70] sm:$0xff]
  %v373 = vld [vmem:[#allocation2 + $0x78] sm:$0xff]
  %v374 = vld [vmem:[#allocation2 + $0x80] sm:$0xff]
  %v375 = vld [vmem:[#allocation2 + $0x88] sm:$0xff]
  %v376 = vld [vmem:[#allocation2 + $0x90] sm:$0xff]
  %v377 = vld [vmem:[#allocation2 + $0x98] sm:$0xff]
  %v378 = vld [vmem:[#allocation2 + $0xa0] sm:$0xff]
  %v379 = vld [vmem:[#allocation2 + $0xa8] sm:$0xff]
  %v380 = vld [vmem:[#allocation2 + $0xb0] sm:$0xff]
  %v381 = vld [vmem:[#allocation2 + $0xb8] sm:$0xff]
  %v382 = vld [vmem:[#allocation2 + $0xc0] sm:$0xff]
  %v383 = vld [vmem:[#allocation2 + $0xc8] sm:$0xff]
  %v384 = vld [vmem:[#allocation2 + $0xd0] sm:$0xff]
  %v385 = vld [vmem:[#allocation2 + $0xd8] sm:$0xff]
  %v386 = vld [vmem:[#allocation2 + $0xe0] sm:$0xff]
  %v387 = vld [vmem:[#allocation2 + $0xe8] sm:$0xff]
  %v388 = vld [vmem:[#allocation2 + $0xf0] sm:$0xff]
  %v389 = vld [vmem:[#allocation2 + $0xf8] sm:$0xff]
  %v390 = vld [vmem:[#allocation2 + $0x100] sm:$0xff]
  %v391 = vld [vmem:[#allocation2 + $0x108] sm:$0xff]
  %v392 = vld [vmem:[#allocation2 + $0x110] sm:$0xff]
  %v393 = vld [vmem:[#allocation2 + $0x118] sm:$0xff]
  %v394 = vld [vmem:[#allocation2 + $0x120] sm:$0xff]
  %v395 = vld [vmem:[#allocation2 + $0x128] sm:$0xff]
  %v396 = vld [vmem:[#allocation2 + $0x130] sm:$0xff]
  %v397 = vld [vmem:[#allocation2 + $0x138] sm:$0xff]
  %v398 = vld [vmem:[#allocation2 + $0x140] sm:$0xff]
  %v399 = vld [vmem:[#allocation2 + $0x148] sm:$0xff]
  %v400 = vld [vmem:[#allocation2 + $0x150] sm:$0xff]
  %v401 = vld [vmem:[#allocation2 + $0x158] sm:$0xff]
  %v402 = vld [vmem:[#allocation2 + $0x160] sm:$0xff]
  %v403 = vld [vmem:[#allocation2 + $0x168] sm:$0xff]
  %v404 = vld [vmem:[#allocation2 + $0x170] sm:$0xff]
  %v405 = vld [vmem:[#allocation2 + $0x178] sm:$0xff]
  %v406 = vld [vmem:[#allocation2 + $0x180] sm:$0xff]
  %v407 = vld [vmem:[#allocation2 + $0x188] sm:$0xff]
  %v408 = vld [vmem:[#allocation2 + $0x190] sm:$0xff]
  %v409 = vld [vmem:[#allocation2 + $0x198] sm:$0xff]
  %v410 = vld [vmem:[#allocation2 + $0x1a0] sm:$0xff]
  %v411 = vld [vmem:[#allocation2 + $0x1a8] sm:$0xff]
  %v412 = vld [vmem:[#allocation2 + $0x1b0] sm:$0xff]
  %v413 = vld [vmem:[#allocation2 + $0x1b8] sm:$0xff]
  %v414 = vld [vmem:[#allocation2 + $0x1c0] sm:$0xff]
  %v415 = vld [vmem:[#allocation2 + $0x1c8] sm:$0xff]
  %v416 = vld [vmem:[#allocation2 + $0x1d0] sm:$0xff]
  %v417 = vld [vmem:[#allocation2 + $0x1d8] sm:$0xff]
  %v418 = vld [vmem:[#allocation2 + $0x1e0] sm:$0xff]
  %v419 = vld [vmem:[#allocation2 + $0x1e8] sm:$0xff]
  %v420 = vld [vmem:[#allocation2 + $0x1f0] sm:$0xff]
  %v421 = vld [vmem:[#allocation2 + $0x1f8] sm:$0xff]
  %v422 = vld [vmem:[#allocation4] sm:$0xf]
  %v424 = vperm.slane %v422, 0
  %v425 = vperm.slane %v422, 1
  %v426 = vperm.slane %v422, 2
  %v427 = vperm.slane %v422, 3
  %432 = vmatpush.msra.mxu0 %v418
  %433 = vmatpush.msra.mxu0 %v414
  %434 = vmatpush.msra.mxu0 %v410
  %435 = vmatpush.msra.mxu0 %v406
  %436 = vmatpush.msra.mxu0 %v402
  %437 = vmatpush.msra.mxu0 %v398
  %438 = vmatpush.msra.mxu0 %v394
  %439 = vmatpush.msra.mxu0 %v390
  %440 = vmatpush.msra.mxu0 %v386
  %441 = vmatpush.msra.mxu0 %v382
  %442 = vmatpush.msra.mxu0 %v378
  %443 = vmatpush.msra.mxu0 %v374
  %444 = vmatpush.msra.mxu0 %v370
  %445 = vmatpush.msra.mxu0 %v366
  %446 = vmatpush.msra.mxu0 %v362
  %447 = vmatpush.msra.mxu0 %v358
  %448 = vmatmul.f32.gmra.mxu0 %v350
  %v449 = vpop.f32.mrf.mxu0
  %v450 = vadd.f32 %v424, %v449
  %451 = vmatmul.f32.gmra.mxu0 %v351
  %v452 = vpop.f32.mrf.mxu0
  %v453 = vadd.f32 %v424, %v452
  %454 = vmatmul.f32.gmra.mxu0 %v352
  %v455 = vpop.f32.mrf.mxu0
  %v456 = vadd.f32 %v424, %v455
  %457 = vmatmul.f32.gmra.mxu0 %v353
  %v458 = vpop.f32.mrf.mxu0
  %v459 = vadd.f32 %v424, %v458
  %460 = vmatmul.f32.gmra.mxu0 %v354
  %v461 = vpop.f32.mrf.mxu0
  %v462 = vadd.f32 %v424, %v461
  %463 = vmatmul.f32.gmra.mxu0 %v355
  %v464 = vpop.f32.mrf.mxu0
  %v465 = vadd.f32 %v424, %v464
  %466 = vmatmul.f32.gmra.mxu0 %v356
  %v467 = vpop.f32.mrf.mxu0
  %v468 = vadd.f32 %v424, %v467
  %469 = vmatmul.f32.gmra.mxu0 %v357
  %v470 = vpop.f32.mrf.mxu0
  %v471 = vadd.f32 %v424, %v470
  %472 = vdwg.mxu0
  %473 = vmatpush.msra.mxu0 %v419
  %474 = vmatpush.msra.mxu0 %v415
  %475 = vmatpush.msra.mxu0 %v411
  %476 = vmatpush.msra.mxu0 %v407
  %477 = vmatpush.msra.mxu0 %v403
  %478 = vmatpush.msra.mxu0 %v399
  %479 = vmatpush.msra.mxu0 %v395
  %480 = vmatpush.msra.mxu0 %v391
  %481 = vmatpush.msra.mxu0 %v387
  %482 = vmatpush.msra.mxu0 %v383
  %483 = vmatpush.msra.mxu0 %v379
  %484 = vmatpush.msra.mxu0 %v375
  %485 = vmatpush.msra.mxu0 %v371
  %486 = vmatpush.msra.mxu0 %v367
  %487 = vmatpush.msra.mxu0 %v363
  %488 = vmatpush.msra.mxu0 %v359
  %489 = vmatmul.f32.gmra.mxu0 %v350
  %v490 = vpop.f32.mrf.mxu0
  %v491 = vadd.f32 %v425, %v490
  %492 = vmatmul.f32.gmra.mxu0 %v351
  %v493 = vpop.f32.mrf.mxu0
  %v494 = vadd.f32 %v425, %v493
  %495 = vmatmul.f32.gmra.mxu0 %v352
  %v496 = vpop.f32.mrf.mxu0
  %v497 = vadd.f32 %v425, %v496
  %498 = vmatmul.f32.gmra.mxu0 %v353
  %v499 = vpop.f32.mrf.mxu0
  %v500 = vadd.f32 %v425, %v499
  %501 = vmatmul.f32.gmra.mxu0 %v354
  %v502 = vpop.f32.mrf.mxu0
  %v503 = vadd.f32 %v425, %v502
  %504 = vmatmul.f32.gmra.mxu0 %v355
  %v505 = vpop.f32.mrf.mxu0
  %v506 = vadd.f32 %v425, %v505
  %507 = vmatmul.f32.gmra.mxu0 %v356
  %v508 = vpop.f32.mrf.mxu0
  %v509 = vadd.f32 %v425, %v508
  %510 = vmatmul.f32.gmra.mxu0 %v357
  %v511 = vpop.f32.mrf.mxu0
  %v512 = vadd.f32 %v425, %v511
  %513 = vdwg.mxu0
  %514 = vmatpush.msra.mxu0 %v420
  %515 = vmatpush.msra.mxu0 %v416
  %516 = vmatpush.msra.mxu0 %v412
  %517 = vmatpush.msra.mxu0 %v408
  %518 = vmatpush.msra.mxu0 %v404
  %519 = vmatpush.msra.mxu0 %v400
  %520 = vmatpush.msra.mxu0 %v396
  %521 = vmatpush.msra.mxu0 %v392
  %522 = vmatpush.msra.mxu0 %v388
  %523 = vmatpush.msra.mxu0 %v384
  %524 = vmatpush.msra.mxu0 %v380
  %525 = vmatpush.msra.mxu0 %v376
  %526 = vmatpush.msra.mxu0 %v372
  %527 = vmatpush.msra.mxu0 %v368
  %528 = vmatpush.msra.mxu0 %v364
  %529 = vmatpush.msra.mxu0 %v360
  %530 = vmatmul.f32.gmra.mxu0 %v350
  %v531 = vpop.f32.mrf.mxu0
  %v532 = vadd.f32 %v426, %v531
  %533 = vmatmul.f32.gmra.mxu0 %v351
  %v534 = vpop.f32.mrf.mxu0
  %v535 = vadd.f32 %v426, %v534
  %536 = vmatmul.f32.gmra.mxu0 %v352
  %v537 = vpop.f32.mrf.mxu0
  %v538 = vadd.f32 %v426, %v537
  %539 = vmatmul.f32.gmra.mxu0 %v353
  %v540 = vpop.f32.mrf.mxu0
  %v541 = vadd.f32 %v426, %v540
  %542 = vmatmul.f32.gmra.mxu0 %v354
  %v543 = vpop.f32.mrf.mxu0
  %v544 = vadd.f32 %v426, %v543
  %545 = vmatmul.f32.gmra.mxu0 %v355
  %v546 = vpop.f32.mrf.mxu0
  %v547 = vadd.f32 %v426, %v546
  %548 = vmatmul.f32.gmra.mxu0 %v356
  %v549 = vpop.f32.mrf.mxu0
  %v550 = vadd.f32 %v426, %v549
  %551 = vmatmul.f32.gmra.mxu0 %v357
  %v552 = vpop.f32.mrf.mxu0
  %v553 = vadd.f32 %v426, %v552
  %554 = vdwg.mxu0
  %555 = vmatpush.msra.mxu0 %v421
  %556 = vmatpush.msra.mxu0 %v417
  %557 = vmatpush.msra.mxu0 %v413
  %558 = vmatpush.msra.mxu0 %v409
  %559 = vmatpush.msra.mxu0 %v405
  %560 = vmatpush.msra.mxu0 %v401
  %561 = vmatpush.msra.mxu0 %v397
  %562 = vmatpush.msra.mxu0 %v393
  %563 = vmatpush.msra.mxu0 %v389
  %564 = vmatpush.msra.mxu0 %v385
  %565 = vmatpush.msra.mxu0 %v381
  %566 = vmatpush.msra.mxu0 %v377
  %567 = vmatpush.msra.mxu0 %v373
  %568 = vmatpush.msra.mxu0 %v369
  %569 = vmatpush.msra.mxu0 %v365
  %570 = vmatpush.msra.mxu0 %v361
  %571 = vmatmul.f32.gmra.mxu0 %v350
  %v572 = vpop.f32.mrf.mxu0
  %v573 = vadd.f32 %v427, %v572
  %574 = vmatmul.f32.gmra.mxu0 %v351
  %v575 = vpop.f32.mrf.mxu0
  %v576 = vadd.f32 %v427, %v575
  %577 = vmatmul.f32.gmra.mxu0 %v352
  %v578 = vpop.f32.mrf.mxu0
  %v579 = vadd.f32 %v427, %v578
  %580 = vmatmul.f32.gmra.mxu0 %v353
  %v581 = vpop.f32.mrf.mxu0
  %v582 = vadd.f32 %v427, %v581
  %583 = vmatmul.f32.gmra.mxu0 %v354
  %v584 = vpop.f32.mrf.mxu0
  %v585 = vadd.f32 %v427, %v584
  %586 = vmatmul.f32.gmra.mxu0 %v355
  %v587 = vpop.f32.mrf.mxu0
  %v588 = vadd.f32 %v427, %v587
  %589 = vmatmul.f32.gmra.mxu0 %v356
  %v590 = vpop.f32.mrf.mxu0
  %v591 = vadd.f32 %v427, %v590
  %592 = vmatmul.f32.gmra.mxu0 %v357
  %v593 = vpop.f32.mrf.mxu0
  %v594 = vadd.f32 %v427, %v593
  %595 = vdwg.mxu0
  %596 = vst [vmem:[#allocation5] sm:$0xff] %v450
  %597 = vst [vmem:[#allocation5 + $0x8] sm:$0xff] %v491
  %598 = vst [vmem:[#allocation5 + $0x10] sm:$0xff] %v532
  %599 = vst [vmem:[#allocation5 + $0x18] sm:$0xff] %v573
  %600 = vst [vmem:[#allocation5 + $0x20] sm:$0xff] %v453
  %601 = vst [vmem:[#allocation5 + $0x28] sm:$0xff] %v494
  %602 = vst [vmem:[#allocation5 + $0x30] sm:$0xff] %v535
  %603 = vst [vmem:[#allocation5 + $0x38] sm:$0xff] %v576
  %604 = vst [vmem:[#allocation5 + $0x40] sm:$0xff] %v456
  %605 = vst [vmem:[#allocation5 + $0x48] sm:$0xff] %v497
  %606 = vst [vmem:[#allocation5 + $0x50] sm:$0xff] %v538
  %607 = vst [vmem:[#allocation5 + $0x58] sm:$0xff] %v579
  %608 = vst [vmem:[#allocation5 + $0x60] sm:$0xff] %v459
  %609 = vst [vmem:[#allocation5 + $0x68] sm:$0xff] %v500
  %610 = vst [vmem:[#allocation5 + $0x70] sm:$0xff] %v541
  %611 = vst [vmem:[#allocation5 + $0x78] sm:$0xff] %v582
  %612 = vst [vmem:[#allocation5 + $0x80] sm:$0xff] %v462
  %613 = vst [vmem:[#allocation5 + $0x88] sm:$0xff] %v503
  %614 = vst [vmem:[#allocation5 + $0x90] sm:$0xff] %v544
  %615 = vst [vmem:[#allocation5 + $0x98] sm:$0xff] %v585
  %616 = vst [vmem:[#allocation5 + $0xa0] sm:$0xff] %v465
  %617 = vst [vmem:[#allocation5 + $0xa8] sm:$0xff] %v506
  %618 = vst [vmem:[#allocation5 + $0xb0] sm:$0xff] %v547
  %619 = vst [vmem:[#allocation5 + $0xb8] sm:$0xff] %v588
  %620 = vst [vmem:[#allocation5 + $0xc0] sm:$0xff] %v468
  %621 = vst [vmem:[#allocation5 + $0xc8] sm:$0xff] %v509
  %622 = vst [vmem:[#allocation5 + $0xd0] sm:$0xff] %v550
  %623 = vst [vmem:[#allocation5 + $0xd8] sm:$0xff] %v591
  %624 = vst [vmem:[#allocation5 + $0xe0] sm:$0xff] %v471
  %625 = vst [vmem:[#allocation5 + $0xe8] sm:$0xff] %v512
  %626 = vst [vmem:[#allocation5 + $0xf0] sm:$0xff] %v553
  %627 = vst [vmem:[#allocation5 + $0xf8] sm:$0xff] %v594
  %v628 = vld [vmem:[#allocation3] sm:$0xff]
  %v629 = vld [vmem:[#allocation3 + $0x8] sm:$0xff]
  %v630 = vld [vmem:[#allocation3 + $0x10] sm:$0xff]
  %v631 = vld [vmem:[#allocation3 + $0x18] sm:$0xff]
  %v632 = vld [vmem:[#allocation3 + $0x20] sm:$0xff]
  %v633 = vld [vmem:[#allocation3 + $0x28] sm:$0xff]
  %v634 = vld [vmem:[#allocation3 + $0x30] sm:$0xff]
  %v635 = vld [vmem:[#allocation3 + $0x38] sm:$0xff]
  %v636 = vld [vmem:[#allocation3 + $0x40] sm:$0xff]
  %v637 = vld [vmem:[#allocation3 + $0x48] sm:$0xff]
  %v638 = vld [vmem:[#allocation3 + $0x50] sm:$0xff]
  %v639 = vld [vmem:[#allocation3 + $0x58] sm:$0xff]
  %v640 = vld [vmem:[#allocation3 + $0x60] sm:$0xff]
  %v641 = vld [vmem:[#allocation3 + $0x68] sm:$0xff]
  %v642 = vld [vmem:[#allocation3 + $0x70] sm:$0xff]
  %v643 = vld [vmem:[#allocation3 + $0x78] sm:$0xff]
  %v644 = vld [vmem:[#allocation3 + $0x80] sm:$0xff]
  %v645 = vld [vmem:[#allocation3 + $0x88] sm:$0xff]
  %v646 = vld [vmem:[#allocation3 + $0x90] sm:$0xff]
  %v647 = vld [vmem:[#allocation3 + $0x98] sm:$0xff]
  %v648 = vld [vmem:[#allocation3 + $0xa0] sm:$0xff]
  %v649 = vld [vmem:[#allocation3 + $0xa8] sm:$0xff]
  %v650 = vld [vmem:[#allocation3 + $0xb0] sm:$0xff]
  %v651 = vld [vmem:[#allocation3 + $0xb8] sm:$0xff]
  %v652 = vld [vmem:[#allocation3 + $0xc0] sm:$0xff]
  %v653 = vld [vmem:[#allocation3 + $0xc8] sm:$0xff]
  %v654 = vld [vmem:[#allocation3 + $0xd0] sm:$0xff]
  %v655 = vld [vmem:[#allocation3 + $0xd8] sm:$0xff]
  %v656 = vld [vmem:[#allocation3 + $0xe0] sm:$0xff]
  %v657 = vld [vmem:[#allocation3 + $0xe8] sm:$0xff]
  %v658 = vld [vmem:[#allocation3 + $0xf0] sm:$0xff]
  %v659 = vld [vmem:[#allocation3 + $0xf8] sm:$0xff]
  %v660 = vld [vmem:[#allocation3 + $0x100] sm:$0xff]
  %v661 = vld [vmem:[#allocation3 + $0x108] sm:$0xff]
  %v662 = vld [vmem:[#allocation3 + $0x110] sm:$0xff]
  %v663 = vld [vmem:[#allocation3 + $0x118] sm:$0xff]
  %v664 = vld [vmem:[#allocation3 + $0x120] sm:$0xff]
  %v665 = vld [vmem:[#allocation3 + $0x128] sm:$0xff]
  %v666 = vld [vmem:[#allocation3 + $0x130] sm:$0xff]
  %v667 = vld [vmem:[#allocation3 + $0x138] sm:$0xff]
  %v668 = vld [vmem:[#allocation3 + $0x140] sm:$0xff]
  %v669 = vld [vmem:[#allocation3 + $0x148] sm:$0xff]
  %v670 = vld [vmem:[#allocation3 + $0x150] sm:$0xff]
  %v671 = vld [vmem:[#allocation3 + $0x158] sm:$0xff]
  %v672 = vld [vmem:[#allocation3 + $0x160] sm:$0xff]
  %v673 = vld [vmem:[#allocation3 + $0x168] sm:$0xff]
  %v674 = vld [vmem:[#allocation3 + $0x170] sm:$0xff]
  %v675 = vld [vmem:[#allocation3 + $0x178] sm:$0xff]
  %v676 = vld [vmem:[#allocation3 + $0x180] sm:$0xff]
  %v677 = vld [vmem:[#allocation3 + $0x188] sm:$0xff]
  %v678 = vld [vmem:[#allocation3 + $0x190] sm:$0xff]
  %v679 = vld [vmem:[#allocation3 + $0x198] sm:$0xff]
  %v680 = vld [vmem:[#allocation3 + $0x1a0] sm:$0xff]
  %v681 = vld [vmem:[#allocation3 + $0x1a8] sm:$0xff]
  %v682 = vld [vmem:[#allocation3 + $0x1b0] sm:$0xff]
  %v683 = vld [vmem:[#allocation3 + $0x1b8] sm:$0xff]
  %v684 = vld [vmem:[#allocation3 + $0x1c0] sm:$0xff]
  %v685 = vld [vmem:[#allocation3 + $0x1c8] sm:$0xff]
  %v686 = vld [vmem:[#allocation3 + $0x1d0] sm:$0xff]
  %v687 = vld [vmem:[#allocation3 + $0x1d8] sm:$0xff]
  %v688 = vld [vmem:[#allocation3 + $0x1e0] sm:$0xff]
  %v689 = vld [vmem:[#allocation3 + $0x1e8] sm:$0xff]
  %v690 = vld [vmem:[#allocation3 + $0x1f0] sm:$0xff]
  %v691 = vld [vmem:[#allocation3 + $0x1f8] sm:$0xff]
  %v692 = vld [vmem:[#allocation6] sm:$0xff]
  %v693 = vld [vmem:[#allocation7] sm:$0xff]
  %v694 = vld [vmem:[#allocation5] sm:$0xff]
  %v695 = vld [vmem:[#allocation5 + $0x8] sm:$0xff]
  %v696 = vld [vmem:[#allocation5 + $0x10] sm:$0xff]
  %v697 = vld [vmem:[#allocation5 + $0x18] sm:$0xff]
  %698 = vmatpush.msra.mxu0 %v688
  %699 = vmatpush.msra.mxu0 %v684
  %700 = vmatpush.msra.mxu0 %v680
  %701 = vmatpush.msra.mxu0 %v676
  %702 = vmatpush.msra.mxu0 %v672
  %703 = vmatpush.msra.mxu0 %v668
  %704 = vmatpush.msra.mxu0 %v664
  %705 = vmatpush.msra.mxu0 %v660
  %706 = vmatpush.msra.mxu0 %v656
  %707 = vmatpush.msra.mxu0 %v652
  %708 = vmatpush.msra.mxu0 %v648
  %709 = vmatpush.msra.mxu0 %v644
  %710 = vmatpush.msra.mxu0 %v640
  %711 = vmatpush.msra.mxu0 %v636
  %712 = vmatpush.msra.mxu0 %v632
  %713 = vmatpush.msra.mxu0 %v628
  %714 = vmatmul.f32.gmra.mxu0 %v692
  %v715 = vpop.f32.mrf.mxu0
  %v716 = vadd.f32 0.0, %v715
  %717 = vdwg.mxu0
  %718 = vmatpush.msra.mxu0 %v689
  %719 = vmatpush.msra.mxu0 %v685
  %720 = vmatpush.msra.mxu0 %v681
  %721 = vmatpush.msra.mxu0 %v677
  %722 = vmatpush.msra.mxu0 %v673
  %723 = vmatpush.msra.mxu0 %v669
  %724 = vmatpush.msra.mxu0 %v665
  %725 = vmatpush.msra.mxu0 %v661
  %726 = vmatpush.msra.mxu0 %v657
  %727 = vmatpush.msra.mxu0 %v653
  %728 = vmatpush.msra.mxu0 %v649
  %729 = vmatpush.msra.mxu0 %v645
  %730 = vmatpush.msra.mxu0 %v641
  %731 = vmatpush.msra.mxu0 %v637
  %732 = vmatpush.msra.mxu0 %v633
  %733 = vmatpush.msra.mxu0 %v629
  %734 = vmatmul.f32.gmra.mxu0 %v692
  %v735 = vpop.f32.mrf.mxu0
  %v736 = vadd.f32 0.0, %v735
  %737 = vdwg.mxu0
  %738 = vmatpush.msra.mxu0 %v690
  %739 = vmatpush.msra.mxu0 %v686
  %740 = vmatpush.msra.mxu0 %v682
  %741 = vmatpush.msra.mxu0 %v678
  %742 = vmatpush.msra.mxu0 %v674
  %743 = vmatpush.msra.mxu0 %v670
  %744 = vmatpush.msra.mxu0 %v666
  %745 = vmatpush.msra.mxu0 %v662
  %746 = vmatpush.msra.mxu0 %v658
  %747 = vmatpush.msra.mxu0 %v654
  %748 = vmatpush.msra.mxu0 %v650
  %749 = vmatpush.msra.mxu0 %v646
  %750 = vmatpush.msra.mxu0 %v642
  %751 = vmatpush.msra.mxu0 %v638
  %752 = vmatpush.msra.mxu0 %v634
  %753 = vmatpush.msra.mxu0 %v630
  %754 = vmatmul.f32.gmra.mxu0 %v692
  %v755 = vpop.f32.mrf.mxu0
  %v756 = vadd.f32 0.0, %v755
  %757 = vdwg.mxu0
  %758 = vmatpush.msra.mxu0 %v691
  %759 = vmatpush.msra.mxu0 %v687
  %760 = vmatpush.msra.mxu0 %v683
  %761 = vmatpush.msra.mxu0 %v679
  %762 = vmatpush.msra.mxu0 %v675
  %763 = vmatpush.msra.mxu0 %v671
  %764 = vmatpush.msra.mxu0 %v667
  %765 = vmatpush.msra.mxu0 %v663
  %766 = vmatpush.msra.mxu0 %v659
  %767 = vmatpush.msra.mxu0 %v655
  %768 = vmatpush.msra.mxu0 %v651
  %769 = vmatpush.msra.mxu0 %v647
  %770 = vmatpush.msra.mxu0 %v643
  %771 = vmatpush.msra.mxu0 %v639
  %772 = vmatpush.msra.mxu0 %v635
  %773 = vmatpush.msra.mxu0 %v631
  %774 = vmatmul.f32.gmra.mxu0 %v692
  %v775 = vpop.f32.mrf.mxu0
  %v776 = vadd.f32 0.0, %v775
  %777 = vdwg.mxu0
  %v778 = vadd.f32 %v694, %v716
  %v779 = vadd.f32 %v695, %v736
  %v780 = vadd.f32 %v696, %v756
  %v781 = vadd.f32 %v697, %v776
  %v782 = vxor.u32 %v778, 2147483648
  %v783 = vmul.f32 %v782, 1.442695
  %v784 = vpow.pop %v783
  %v785 = vadd.f32 %v784, 1.0
  %v786 = vrcp.pop %v785
  %v787 = vmul.f32 %v785, %v786
  %v788 = vsub.f32 1.0, %v787
  %v789 = vmul.f32 %v786, %v788
  %v790 = vadd.f32 %v786, %v789
  %vm791 = vweird.f32 %v785
  %vm792 = vweird.f32 %v786
  %vm793 = vmor %vm791, %vm792
  %v794 = vsel %vm793, %v786, %v790
  %v795 = vand.u32 2147483647, %v785
  %vm796 = vcmp.eq.f32.partialorder %v795, 8.507059e+37
  %v797 = vand.u32 %v785, 2147483648
  %v798 = vor.u32 1.1754944e-38, %v797
  %v799 = vsel %vm796, %v798, %v794
  %v800 = vmul.f32 1.0, %v799
  %v801 = vxor.u32 %v779, 2147483648
  %v802 = vmul.f32 %v801, 1.442695
  %v803 = vpow.pop %v802
  %v804 = vadd.f32 %v803, 1.0
  %v805 = vrcp.pop %v804
  %v806 = vmul.f32 %v804, %v805
  %v807 = vsub.f32 1.0, %v806
  %v808 = vmul.f32 %v805, %v807
  %v809 = vadd.f32 %v805, %v808
  %vm810 = vweird.f32 %v804
  %vm811 = vweird.f32 %v805
  %vm812 = vmor %vm810, %vm811
  %v813 = vsel %vm812, %v805, %v809
  %v814 = vand.u32 2147483647, %v804
  %vm815 = vcmp.eq.f32.partialorder %v814, 8.507059e+37
  %v816 = vand.u32 %v804, 2147483648
  %v817 = vor.u32 1.1754944e-38, %v816
  %v818 = vsel %vm815, %v817, %v813
  %v819 = vmul.f32 1.0, %v818
  %v820 = vtanh.pop %v780
  %v821 = vxor.u32 %v781, 2147483648
  %v822 = vmul.f32 %v821, 1.442695
  %v823 = vpow.pop %v822
  %v824 = vadd.f32 %v823, 1.0
  %v825 = vrcp.pop %v824
  %v826 = vmul.f32 %v824, %v825
  %v827 = vsub.f32 1.0, %v826
  %v828 = vmul.f32 %v825, %v827
  %v829 = vadd.f32 %v825, %v828
  %vm830 = vweird.f32 %v824
  %vm831 = vweird.f32 %v825
  %vm832 = vmor %vm830, %vm831
  %v833 = vsel %vm832, %v825, %v829
  %v834 = vand.u32 2147483647, %v824
  %vm835 = vcmp.eq.f32.partialorder %v834, 8.507059e+37
  %v836 = vand.u32 %v824, 2147483648
  %v837 = vor.u32 1.1754944e-38, %v836
  %v838 = vsel %vm835, %v837, %v833
  %v839 = vmul.f32 1.0, %v838
  %v840 = vmul.f32 %v819, %v693
  %v841 = vmul.f32 %v800, %v820
  %v842 = vadd.f32 %v840, %v841
  %v843 = vtanh.pop %v842
  %v844 = vmul.f32 %v839, %v843
  %845 = vst [vmem:[%s4] sm:$0xff] %v844
  %v846 = vld [vmem:[#allocation5 + $0x20] sm:$0xff]
  %v847 = vld [vmem:[#allocation5 + $0x28] sm:$0xff]
  %v848 = vld [vmem:[#allocation5 + $0x30] sm:$0xff]
  %v849 = vld [vmem:[#allocation5 + $0x38] sm:$0xff]
  %850 = vmatpush.msra.mxu0 %v688
  %851 = vmatpush.msra.mxu0 %v684
  %852 = vmatpush.msra.mxu0 %v680
  %853 = vmatpush.msra.mxu0 %v676
  %854 = vmatpush.msra.mxu0 %v672
  %855 = vmatpush.msra.mxu0 %v668
  %856 = vmatpush.msra.mxu0 %v664
  %857 = vmatpush.msra.mxu0 %v660
  %858 = vmatpush.msra.mxu0 %v656
  %859 = vmatpush.msra.mxu0 %v652
  %860 = vmatpush.msra.mxu0 %v648
  %861 = vmatpush.msra.mxu0 %v644
  %862 = vmatpush.msra.mxu0 %v640
  %863 = vmatpush.msra.mxu0 %v636
  %864 = vmatpush.msra.mxu0 %v632
  %865 = vmatpush.msra.mxu0 %v628
  %866 = vmatmul.f32.gmra.mxu0 %v844
  %v867 = vpop.f32.mrf.mxu0
  %v868 = vadd.f32 0.0, %v867
  %869 = vdwg.mxu0
  %870 = vmatpush.msra.mxu0 %v689
  %871 = vmatpush.msra.mxu0 %v685
  %872 = vmatpush.msra.mxu0 %v681
  %873 = vmatpush.msra.mxu0 %v677
  %874 = vmatpush.msra.mxu0 %v673
  %875 = vmatpush.msra.mxu0 %v669
  %876 = vmatpush.msra.mxu0 %v665
  %877 = vmatpush.msra.mxu0 %v661
  %878 = vmatpush.msra.mxu0 %v657
  %879 = vmatpush.msra.mxu0 %v653
  %880 = vmatpush.msra.mxu0 %v649
  %881 = vmatpush.msra.mxu0 %v645
  %882 = vmatpush.msra.mxu0 %v641
  %883 = vmatpush.msra.mxu0 %v637
  %884 = vmatpush.msra.mxu0 %v633
  %885 = vmatpush.msra.mxu0 %v629
  %886 = vmatmul.f32.gmra.mxu0 %v844
  %v887 = vpop.f32.mrf.mxu0
  %v888 = vadd.f32 0.0, %v887
  %889 = vdwg.mxu0
  %890 = vmatpush.msra.mxu0 %v690
  %891 = vmatpush.msra.mxu0 %v686
  %892 = vmatpush.msra.mxu0 %v682
  %893 = vmatpush.msra.mxu0 %v678
  %894 = vmatpush.msra.mxu0 %v674
  %895 = vmatpush.msra.mxu0 %v670
  %896 = vmatpush.msra.mxu0 %v666
  %897 = vmatpush.msra.mxu0 %v662
  %898 = vmatpush.msra.mxu0 %v658
  %899 = vmatpush.msra.mxu0 %v654
  %900 = vmatpush.msra.mxu0 %v650
  %901 = vmatpush.msra.mxu0 %v646
  %902 = vmatpush.msra.mxu0 %v642
  %903 = vmatpush.msra.mxu0 %v638
  %904 = vmatpush.msra.mxu0 %v634
  %905 = vmatpush.msra.mxu0 %v630
  %906 = vmatmul.f32.gmra.mxu0 %v844
  %v907 = vpop.f32.mrf.mxu0
  %v908 = vadd.f32 0.0, %v907
  %909 = vdwg.mxu0
  %910 = vmatpush.msra.mxu0 %v691
  %911 = vmatpush.msra.mxu0 %v687
  %912 = vmatpush.msra.mxu0 %v683
  %913 = vmatpush.msra.mxu0 %v679
  %914 = vmatpush.msra.mxu0 %v675
  %915 = vmatpush.msra.mxu0 %v671
  %916 = vmatpush.msra.mxu0 %v667
  %917 = vmatpush.msra.mxu0 %v663
  %918 = vmatpush.msra.mxu0 %v659
  %919 = vmatpush.msra.mxu0 %v655
  %920 = vmatpush.msra.mxu0 %v651
  %921 = vmatpush.msra.mxu0 %v647
  %922 = vmatpush.msra.mxu0 %v643
  %923 = vmatpush.msra.mxu0 %v639
  %924 = vmatpush.msra.mxu0 %v635
  %925 = vmatpush.msra.mxu0 %v631
  %926 = vmatmul.f32.gmra.mxu0 %v844
  %v927 = vpop.f32.mrf.mxu0
  %v928 = vadd.f32 0.0, %v927
  %929 = vdwg.mxu0
  %v930 = vadd.f32 %v846, %v868
  %v931 = vadd.f32 %v847, %v888
  %v932 = vadd.f32 %v848, %v908
  %v933 = vadd.f32 %v849, %v928
  %v934 = vxor.u32 %v930, 2147483648
  %v935 = vmul.f32 %v934, 1.442695
  %v936 = vpow.pop %v935
  %v937 = vadd.f32 %v936, 1.0
  %v938 = vrcp.pop %v937
  %v939 = vmul.f32 %v937, %v938
  %v940 = vsub.f32 1.0, %v939
  %v941 = vmul.f32 %v938, %v940
  %v942 = vadd.f32 %v938, %v941
  %vm943 = vweird.f32 %v937
  %vm944 = vweird.f32 %v938
  %vm945 = vmor %vm943, %vm944
  %v946 = vsel %vm945, %v938, %v942
  %v947 = vand.u32 2147483647, %v937
  %vm948 = vcmp.eq.f32.partialorder %v947, 8.507059e+37
  %v949 = vand.u32 %v937, 2147483648
  %v950 = vor.u32 1.1754944e-38, %v949
  %v951 = vsel %vm948, %v950, %v946
  %v952 = vmul.f32 1.0, %v951
  %v953 = vxor.u32 %v931, 2147483648
  %v954 = vmul.f32 %v953, 1.442695
  %v955 = vpow.pop %v954
  %v956 = vadd.f32 %v955, 1.0
  %v957 = vrcp.pop %v956
  %v958 = vmul.f32 %v956, %v957
  %v959 = vsub.f32 1.0, %v958
  %v960 = vmul.f32 %v957, %v959
  %v961 = vadd.f32 %v957, %v960
  %vm962 = vweird.f32 %v956
  %vm963 = vweird.f32 %v957
  %vm964 = vmor %vm962, %vm963
  %v965 = vsel %vm964, %v957, %v961
  %v966 = vand.u32 2147483647, %v956
  %vm967 = vcmp.eq.f32.partialorder %v966, 8.507059e+37
  %v968 = vand.u32 %v956, 2147483648
  %v969 = vor.u32 1.1754944e-38, %v968
  %v970 = vsel %vm967, %v969, %v965
  %v971 = vmul.f32 1.0, %v970
  %v972 = vtanh.pop %v932
  %v973 = vxor.u32 %v933, 2147483648
  %v974 = vmul.f32 %v973, 1.442695
  %v975 = vpow.pop %v974
  %v976 = vadd.f32 %v975, 1.0
  %v977 = vrcp.pop %v976
  %v978 = vmul.f32 %v976, %v977
  %v979 = vsub.f32 1.0, %v978
  %v980 = vmul.f32 %v977, %v979
  %v981 = vadd.f32 %v977, %v980
  %vm982 = vweird.f32 %v976
  %vm983 = vweird.f32 %v977
  %vm984 = vmor %vm982, %vm983
  %v985 = vsel %vm984, %v977, %v981
  %v986 = vand.u32 2147483647, %v976
  %vm987 = vcmp.eq.f32.partialorder %v986, 8.507059e+37
  %v988 = vand.u32 %v976, 2147483648
  %v989 = vor.u32 1.1754944e-38, %v988
  %v990 = vsel %vm987, %v989, %v985
  %v991 = vmul.f32 1.0, %v990
  %v992 = vmul.f32 %v971, %v842
  %v993 = vmul.f32 %v952, %v972
  %v994 = vadd.f32 %v992, %v993
  %v995 = vtanh.pop %v994
  %v996 = vmul.f32 %v991, %v995
  %997 = vst [vmem:[%s4 + $0x8] sm:$0xff] %v996
  %v998 = vld [vmem:[#allocation5 + $0x40] sm:$0xff]
  %v999 = vld [vmem:[#allocation5 + $0x48] sm:$0xff]
  %v1000 = vld [vmem:[#allocation5 + $0x50] sm:$0xff]
  %v1001 = vld [vmem:[#allocation5 + $0x58] sm:$0xff]
  %1002 = vmatpush.msra.mxu0 %v688
  %1003 = vmatpush.msra.mxu0 %v684
  %1004 = vmatpush.msra.mxu0 %v680
  %1005 = vmatpush.msra.mxu0 %v676
  %1006 = vmatpush.msra.mxu0 %v672
  %1007 = vmatpush.msra.mxu0 %v668
  %1008 = vmatpush.msra.mxu0 %v664
  %1009 = vmatpush.msra.mxu0 %v660
  %1010 = vmatpush.msra.mxu0 %v656
  %1011 = vmatpush.msra.mxu0 %v652
  %1012 = vmatpush.msra.mxu0 %v648
  %1013 = vmatpush.msra.mxu0 %v644
  %1014 = vmatpush.msra.mxu0 %v640
  %1015 = vmatpush.msra.mxu0 %v636
  %1016 = vmatpush.msra.mxu0 %v632
  %1017 = vmatpush.msra.mxu0 %v628
  %1018 = vmatmul.f32.gmra.mxu0 %v996
  %v1019 = vpop.f32.mrf.mxu0
  %v1020 = vadd.f32 0.0, %v1019
  %1021 = vdwg.mxu0
  %1022 = vmatpush.msra.mxu0 %v689
  %1023 = vmatpush.msra.mxu0 %v685
  %1024 = vmatpush.msra.mxu0 %v681
  %1025 = vmatpush.msra.mxu0 %v677
  %1026 = vmatpush.msra.mxu0 %v673
  %1027 = vmatpush.msra.mxu0 %v669
  %1028 = vmatpush.msra.mxu0 %v665
  %1029 = vmatpush.msra.mxu0 %v661
  %1030 = vmatpush.msra.mxu0 %v657
  %1031 = vmatpush.msra.mxu0 %v653
  %1032 = vmatpush.msra.mxu0 %v649
  %1033 = vmatpush.msra.mxu0 %v645
  %1034 = vmatpush.msra.mxu0 %v641
  %1035 = vmatpush.msra.mxu0 %v637
  %1036 = vmatpush.msra.mxu0 %v633
  %1037 = vmatpush.msra.mxu0 %v629
  %1038 = vmatmul.f32.gmra.mxu0 %v996
  %v1039 = vpop.f32.mrf.mxu0
  %v1040 = vadd.f32 0.0, %v1039
  %1041 = vdwg.mxu0
  %1042 = vmatpush.msra.mxu0 %v690
  %1043 = vmatpush.msra.mxu0 %v686
  %1044 = vmatpush.msra.mxu0 %v682
  %1045 = vmatpush.msra.mxu0 %v678
  %1046 = vmatpush.msra.mxu0 %v674
  %1047 = vmatpush.msra.mxu0 %v670
  %1048 = vmatpush.msra.mxu0 %v666
  %1049 = vmatpush.msra.mxu0 %v662
  %1050 = vmatpush.msra.mxu0 %v658
  %1051 = vmatpush.msra.mxu0 %v654
  %1052 = vmatpush.msra.mxu0 %v650
  %1053 = vmatpush.msra.mxu0 %v646
  %1054 = vmatpush.msra.mxu0 %v642
  %1055 = vmatpush.msra.mxu0 %v638
  %1056 = vmatpush.msra.mxu0 %v634
  %1057 = vmatpush.msra.mxu0 %v630
  %1058 = vmatmul.f32.gmra.mxu0 %v996
  %v1059 = vpop.f32.mrf.mxu0
  %v1060 = vadd.f32 0.0, %v1059
  %1061 = vdwg.mxu0
  %1062 = vmatpush.msra.mxu0 %v691
  %1063 = vmatpush.msra.mxu0 %v687
  %1064 = vmatpush.msra.mxu0 %v683
  %1065 = vmatpush.msra.mxu0 %v679
  %1066 = vmatpush.msra.mxu0 %v675
  %1067 = vmatpush.msra.mxu0 %v671
  %1068 = vmatpush.msra.mxu0 %v667
  %1069 = vmatpush.msra.mxu0 %v663
  %1070 = vmatpush.msra.mxu0 %v659
  %1071 = vmatpush.msra.mxu0 %v655
  %1072 = vmatpush.msra.mxu0 %v651
  %1073 = vmatpush.msra.mxu0 %v647
  %1074 = vmatpush.msra.mxu0 %v643
  %1075 = vmatpush.msra.mxu0 %v639
  %1076 = vmatpush.msra.mxu0 %v635
  %1077 = vmatpush.msra.mxu0 %v631
  %1078 = vmatmul.f32.gmra.mxu0 %v996
  %v1079 = vpop.f32.mrf.mxu0
  %v1080 = vadd.f32 0.0, %v1079
  %1081 = vdwg.mxu0
  %v1082 = vadd.f32 %v998, %v1020
  %v1083 = vadd.f32 %v999, %v1040
  %v1084 = vadd.f32 %v1000, %v1060
  %v1085 = vadd.f32 %v1001, %v1080
  %v1086 = vxor.u32 %v1082, 2147483648
  %v1087 = vmul.f32 %v1086, 1.442695
  %v1088 = vpow.pop %v1087
  %v1089 = vadd.f32 %v1088, 1.0
  %v1090 = vrcp.pop %v1089
  %v1091 = vmul.f32 %v1089, %v1090
  %v1092 = vsub.f32 1.0, %v1091
  %v1093 = vmul.f32 %v1090, %v1092
  %v1094 = vadd.f32 %v1090, %v1093
  %vm1095 = vweird.f32 %v1089
  %vm1096 = vweird.f32 %v1090
  %vm1097 = vmor %vm1095, %vm1096
  %v1098 = vsel %vm1097, %v1090, %v1094
  %v1099 = vand.u32 2147483647, %v1089
  %vm1100 = vcmp.eq.f32.partialorder %v1099, 8.507059e+37
  %v1101 = vand.u32 %v1089, 2147483648
  %v1102 = vor.u32 1.1754944e-38, %v1101
  %v1103 = vsel %vm1100, %v1102, %v1098
  %v1104 = vmul.f32 1.0, %v1103
  %v1105 = vxor.u32 %v1083, 2147483648
  %v1106 = vmul.f32 %v1105, 1.442695
  %v1107 = vpow.pop %v1106
  %v1108 = vadd.f32 %v1107, 1.0
  %v1109 = vrcp.pop %v1108
  %v1110 = vmul.f32 %v1108, %v1109
  %v1111 = vsub.f32 1.0, %v1110
  %v1112 = vmul.f32 %v1109, %v1111
  %v1113 = vadd.f32 %v1109, %v1112
  %vm1114 = vweird.f32 %v1108
  %vm1115 = vweird.f32 %v1109
  %vm1116 = vmor %vm1114, %vm1115
  %v1117 = vsel %vm1116, %v1109, %v1113
  %v1118 = vand.u32 2147483647, %v1108
  %vm1119 = vcmp.eq.f32.partialorder %v1118, 8.507059e+37
  %v1120 = vand.u32 %v1108, 2147483648
  %v1121 = vor.u32 1.1754944e-38, %v1120
  %v1122 = vsel %vm1119, %v1121, %v1117
  %v1123 = vmul.f32 1.0, %v1122
  %v1124 = vtanh.pop %v1084
  %v1125 = vxor.u32 %v1085, 2147483648
  %v1126 = vmul.f32 %v1125, 1.442695
  %v1127 = vpow.pop %v1126
  %v1128 = vadd.f32 %v1127, 1.0
  %v1129 = vrcp.pop %v1128
  %v1130 = vmul.f32 %v1128, %v1129
  %v1131 = vsub.f32 1.0, %v1130
  %v1132 = vmul.f32 %v1129, %v1131
  %v1133 = vadd.f32 %v1129, %v1132
  %vm1134 = vweird.f32 %v1128
  %vm1135 = vweird.f32 %v1129
  %vm1136 = vmor %vm1134, %vm1135
  %v1137 = vsel %vm1136, %v1129, %v1133
  %v1138 = vand.u32 2147483647, %v1128
  %vm1139 = vcmp.eq.f32.partialorder %v1138, 8.507059e+37
  %v1140 = vand.u32 %v1128, 2147483648
  %v1141 = vor.u32 1.1754944e-38, %v1140
  %v1142 = vsel %vm1139, %v1141, %v1137
  %v1143 = vmul.f32 1.0, %v1142
  %v1144 = vmul.f32 %v1123, %v994
  %v1145 = vmul.f32 %v1104, %v1124
  %v1146 = vadd.f32 %v1144, %v1145
  %v1147 = vtanh.pop %v1146
  %v1148 = vmul.f32 %v1143, %v1147
  %1149 = vst [vmem:[%s4 + $0x10] sm:$0xff] %v1148
  %v1150 = vld [vmem:[#allocation5 + $0x60] sm:$0xff]
  %v1151 = vld [vmem:[#allocation5 + $0x68] sm:$0xff]
  %v1152 = vld [vmem:[#allocation5 + $0x70] sm:$0xff]
  %v1153 = vld [vmem:[#allocation5 + $0x78] sm:$0xff]
  %1154 = vmatpush.msra.mxu0 %v688
  %1155 = vmatpush.msra.mxu0 %v684
  %1156 = vmatpush.msra.mxu0 %v680
  %1157 = vmatpush.msra.mxu0 %v676
  %1158 = vmatpush.msra.mxu0 %v672
  %1159 = vmatpush.msra.mxu0 %v668
  %1160 = vmatpush.msra.mxu0 %v664
  %1161 = vmatpush.msra.mxu0 %v660
  %1162 = vmatpush.msra.mxu0 %v656
  %1163 = vmatpush.msra.mxu0 %v652
  %1164 = vmatpush.msra.mxu0 %v648
  %1165 = vmatpush.msra.mxu0 %v644
  %1166 = vmatpush.msra.mxu0 %v640
  %1167 = vmatpush.msra.mxu0 %v636
  %1168 = vmatpush.msra.mxu0 %v632
  %1169 = vmatpush.msra.mxu0 %v628
  %1170 = vmatmul.f32.gmra.mxu0 %v1148
  %v1171 = vpop.f32.mrf.mxu0
  %v1172 = vadd.f32 0.0, %v1171
  %1173 = vdwg.mxu0
  %1174 = vmatpush.msra.mxu0 %v689
  %1175 = vmatpush.msra.mxu0 %v685
  %1176 = vmatpush.msra.mxu0 %v681
  %1177 = vmatpush.msra.mxu0 %v677
  %1178 = vmatpush.msra.mxu0 %v673
  %1179 = vmatpush.msra.mxu0 %v669
  %1180 = vmatpush.msra.mxu0 %v665
  %1181 = vmatpush.msra.mxu0 %v661
  %1182 = vmatpush.msra.mxu0 %v657
  %1183 = vmatpush.msra.mxu0 %v653
  %1184 = vmatpush.msra.mxu0 %v649
  %1185 = vmatpush.msra.mxu0 %v645
  %1186 = vmatpush.msra.mxu0 %v641
  %1187 = vmatpush.msra.mxu0 %v637
  %1188 = vmatpush.msra.mxu0 %v633
  %1189 = vmatpush.msra.mxu0 %v629
  %1190 = vmatmul.f32.gmra.mxu0 %v1148
  %v1191 = vpop.f32.mrf.mxu0
  %v1192 = vadd.f32 0.0, %v1191
  %1193 = vdwg.mxu0
  %1194 = vmatpush.msra.mxu0 %v690
  %1195 = vmatpush.msra.mxu0 %v686
  %1196 = vmatpush.msra.mxu0 %v682
  %1197 = vmatpush.msra.mxu0 %v678
  %1198 = vmatpush.msra.mxu0 %v674
  %1199 = vmatpush.msra.mxu0 %v670
  %1200 = vmatpush.msra.mxu0 %v666
  %1201 = vmatpush.msra.mxu0 %v662
  %1202 = vmatpush.msra.mxu0 %v658
  %1203 = vmatpush.msra.mxu0 %v654
  %1204 = vmatpush.msra.mxu0 %v650
  %1205 = vmatpush.msra.mxu0 %v646
  %1206 = vmatpush.msra.mxu0 %v642
  %1207 = vmatpush.msra.mxu0 %v638
  %1208 = vmatpush.msra.mxu0 %v634
  %1209 = vmatpush.msra.mxu0 %v630
  %1210 = vmatmul.f32.gmra.mxu0 %v1148
  %v1211 = vpop.f32.mrf.mxu0
  %v1212 = vadd.f32 0.0, %v1211
  %1213 = vdwg.mxu0
  %1214 = vmatpush.msra.mxu0 %v691
  %1215 = vmatpush.msra.mxu0 %v687
  %1216 = vmatpush.msra.mxu0 %v683
  %1217 = vmatpush.msra.mxu0 %v679
  %1218 = vmatpush.msra.mxu0 %v675
  %1219 = vmatpush.msra.mxu0 %v671
  %1220 = vmatpush.msra.mxu0 %v667
  %1221 = vmatpush.msra.mxu0 %v663
  %1222 = vmatpush.msra.mxu0 %v659
  %1223 = vmatpush.msra.mxu0 %v655
  %1224 = vmatpush.msra.mxu0 %v651
  %1225 = vmatpush.msra.mxu0 %v647
  %1226 = vmatpush.msra.mxu0 %v643
  %1227 = vmatpush.msra.mxu0 %v639
  %1228 = vmatpush.msra.mxu0 %v635
  %1229 = vmatpush.msra.mxu0 %v631
  %1230 = vmatmul.f32.gmra.mxu0 %v1148
  %v1231 = vpop.f32.mrf.mxu0
  %v1232 = vadd.f32 0.0, %v1231
  %1233 = vdwg.mxu0
  %v1234 = vadd.f32 %v1150, %v1172
  %v1235 = vadd.f32 %v1151, %v1192
  %v1236 = vadd.f32 %v1152, %v1212
  %v1237 = vadd.f32 %v1153, %v1232
  %v1238 = vxor.u32 %v1234, 2147483648
  %v1239 = vmul.f32 %v1238, 1.442695
  %v1240 = vpow.pop %v1239
  %v1241 = vadd.f32 %v1240, 1.0
  %v1242 = vrcp.pop %v1241
  %v1243 = vmul.f32 %v1241, %v1242
  %v1244 = vsub.f32 1.0, %v1243
  %v1245 = vmul.f32 %v1242, %v1244
  %v1246 = vadd.f32 %v1242, %v1245
  %vm1247 = vweird.f32 %v1241
  %vm1248 = vweird.f32 %v1242
  %vm1249 = vmor %vm1247, %vm1248
  %v1250 = vsel %vm1249, %v1242, %v1246
  %v1251 = vand.u32 2147483647, %v1241
  %vm1252 = vcmp.eq.f32.partialorder %v1251, 8.507059e+37
  %v1253 = vand.u32 %v1241, 2147483648
  %v1254 = vor.u32 1.1754944e-38, %v1253
  %v1255 = vsel %vm1252, %v1254, %v1250
  %v1256 = vmul.f32 1.0, %v1255
  %v1257 = vxor.u32 %v1235, 2147483648
  %v1258 = vmul.f32 %v1257, 1.442695
  %v1259 = vpow.pop %v1258
  %v1260 = vadd.f32 %v1259, 1.0
  %v1261 = vrcp.pop %v1260
  %v1262 = vmul.f32 %v1260, %v1261
  %v1263 = vsub.f32 1.0, %v1262
  %v1264 = vmul.f32 %v1261, %v1263
  %v1265 = vadd.f32 %v1261, %v1264
  %vm1266 = vweird.f32 %v1260
  %vm1267 = vweird.f32 %v1261
  %vm1268 = vmor %vm1266, %vm1267
  %v1269 = vsel %vm1268, %v1261, %v1265
  %v1270 = vand.u32 2147483647, %v1260
  %vm1271 = vcmp.eq.f32.partialorder %v1270, 8.507059e+37
  %v1272 = vand.u32 %v1260, 2147483648
  %v1273 = vor.u32 1.1754944e-38, %v1272
  %v1274 = vsel %vm1271, %v1273, %v1269
  %v1275 = vmul.f32 1.0, %v1274
  %v1276 = vtanh.pop %v1236
  %v1277 = vxor.u32 %v1237, 2147483648
  %v1278 = vmul.f32 %v1277, 1.442695
  %v1279 = vpow.pop %v1278
  %v1280 = vadd.f32 %v1279, 1.0
  %v1281 = vrcp.pop %v1280
  %v1282 = vmul.f32 %v1280, %v1281
  %v1283 = vsub.f32 1.0, %v1282
  %v1284 = vmul.f32 %v1281, %v1283
  %v1285 = vadd.f32 %v1281, %v1284
  %vm1286 = vweird.f32 %v1280
  %vm1287 = vweird.f32 %v1281
  %vm1288 = vmor %vm1286, %vm1287
  %v1289 = vsel %vm1288, %v1281, %v1285
  %v1290 = vand.u32 2147483647, %v1280
  %vm1291 = vcmp.eq.f32.partialorder %v1290, 8.507059e+37
  %v1292 = vand.u32 %v1280, 2147483648
  %v1293 = vor.u32 1.1754944e-38, %v1292
  %v1294 = vsel %vm1291, %v1293, %v1289
  %v1295 = vmul.f32 1.0, %v1294
  %v1296 = vmul.f32 %v1275, %v1146
  %v1297 = vmul.f32 %v1256, %v1276
  %v1298 = vadd.f32 %v1296, %v1297
  %v1299 = vtanh.pop %v1298
  %v1300 = vmul.f32 %v1295, %v1299
  %1301 = vst [vmem:[%s4 + $0x18] sm:$0xff] %v1300
  %v1302 = vld [vmem:[#allocation5 + $0x80] sm:$0xff]
  %v1303 = vld [vmem:[#allocation5 + $0x88] sm:$0xff]
  %v1304 = vld [vmem:[#allocation5 + $0x90] sm:$0xff]
  %v1305 = vld [vmem:[#allocation5 + $0x98] sm:$0xff]
  %1306 = vmatpush.msra.mxu0 %v688
  %1307 = vmatpush.msra.mxu0 %v684
  %1308 = vmatpush.msra.mxu0 %v680
  %1309 = vmatpush.msra.mxu0 %v676
  %1310 = vmatpush.msra.mxu0 %v672
  %1311 = vmatpush.msra.mxu0 %v668
  %1312 = vmatpush.msra.mxu0 %v664
  %1313 = vmatpush.msra.mxu0 %v660
  %1314 = vmatpush.msra.mxu0 %v656
  %1315 = vmatpush.msra.mxu0 %v652
  %1316 = vmatpush.msra.mxu0 %v648
  %1317 = vmatpush.msra.mxu0 %v644
  %1318 = vmatpush.msra.mxu0 %v640
  %1319 = vmatpush.msra.mxu0 %v636
  %1320 = vmatpush.msra.mxu0 %v632
  %1321 = vmatpush.msra.mxu0 %v628
  %1322 = vmatmul.f32.gmra.mxu0 %v1300
  %v1323 = vpop.f32.mrf.mxu0
  %v1324 = vadd.f32 0.0, %v1323
  %1325 = vdwg.mxu0
  %1326 = vmatpush.msra.mxu0 %v689
  %1327 = vmatpush.msra.mxu0 %v685
  %1328 = vmatpush.msra.mxu0 %v681
  %1329 = vmatpush.msra.mxu0 %v677
  %1330 = vmatpush.msra.mxu0 %v673
  %1331 = vmatpush.msra.mxu0 %v669
  %1332 = vmatpush.msra.mxu0 %v665
  %1333 = vmatpush.msra.mxu0 %v661
  %1334 = vmatpush.msra.mxu0 %v657
  %1335 = vmatpush.msra.mxu0 %v653
  %1336 = vmatpush.msra.mxu0 %v649
  %1337 = vmatpush.msra.mxu0 %v645
  %1338 = vmatpush.msra.mxu0 %v641
  %1339 = vmatpush.msra.mxu0 %v637
  %1340 = vmatpush.msra.mxu0 %v633
  %1341 = vmatpush.msra.mxu0 %v629
  %1342 = vmatmul.f32.gmra.mxu0 %v1300
  %v1343 = vpop.f32.mrf.mxu0
  %v1344 = vadd.f32 0.0, %v1343
  %1345 = vdwg.mxu0
  %1346 = vmatpush.msra.mxu0 %v690
  %1347 = vmatpush.msra.mxu0 %v686
  %1348 = vmatpush.msra.mxu0 %v682
  %1349 = vmatpush.msra.mxu0 %v678
  %1350 = vmatpush.msra.mxu0 %v674
  %1351 = vmatpush.msra.mxu0 %v670
  %1352 = vmatpush.msra.mxu0 %v666
  %1353 = vmatpush.msra.mxu0 %v662
  %1354 = vmatpush.msra.mxu0 %v658
  %1355 = vmatpush.msra.mxu0 %v654
  %1356 = vmatpush.msra.mxu0 %v650
  %1357 = vmatpush.msra.mxu0 %v646
  %1358 = vmatpush.msra.mxu0 %v642
  %1359 = vmatpush.msra.mxu0 %v638
  %1360 = vmatpush.msra.mxu0 %v634
  %1361 = vmatpush.msra.mxu0 %v630
  %1362 = vmatmul.f32.gmra.mxu0 %v1300
  %v1363 = vpop.f32.mrf.mxu0
  %v1364 = vadd.f32 0.0, %v1363
  %1365 = vdwg.mxu0
  %1366 = vmatpush.msra.mxu0 %v691
  %1367 = vmatpush.msra.mxu0 %v687
  %1368 = vmatpush.msra.mxu0 %v683
  %1369 = vmatpush.msra.mxu0 %v679
  %1370 = vmatpush.msra.mxu0 %v675
  %1371 = vmatpush.msra.mxu0 %v671
  %1372 = vmatpush.msra.mxu0 %v667
  %1373 = vmatpush.msra.mxu0 %v663
  %1374 = vmatpush.msra.mxu0 %v659
  %1375 = vmatpush.msra.mxu0 %v655
  %1376 = vmatpush.msra.mxu0 %v651
  %1377 = vmatpush.msra.mxu0 %v647
  %1378 = vmatpush.msra.mxu0 %v643
  %1379 = vmatpush.msra.mxu0 %v639
  %1380 = vmatpush.msra.mxu0 %v635
  %1381 = vmatpush.msra.mxu0 %v631
  %1382 = vmatmul.f32.gmra.mxu0 %v1300
  %v1383 = vpop.f32.mrf.mxu0
  %v1384 = vadd.f32 0.0, %v1383
  %1385 = vdwg.mxu0
  %v1386 = vadd.f32 %v1302, %v1324
  %v1387 = vadd.f32 %v1303, %v1344
  %v1388 = vadd.f32 %v1304, %v1364
  %v1389 = vadd.f32 %v1305, %v1384
  %v1390 = vxor.u32 %v1386, 2147483648
  %v1391 = vmul.f32 %v1390, 1.442695
  %v1392 = vpow.pop %v1391
  %v1393 = vadd.f32 %v1392, 1.0
  %v1394 = vrcp.pop %v1393
  %v1395 = vmul.f32 %v1393, %v1394
  %v1396 = vsub.f32 1.0, %v1395
  %v1397 = vmul.f32 %v1394, %v1396
  %v1398 = vadd.f32 %v1394, %v1397
  %vm1399 = vweird.f32 %v1393
  %vm1400 = vweird.f32 %v1394
  %vm1401 = vmor %vm1399, %vm1400
  %v1402 = vsel %vm1401, %v1394, %v1398
  %v1403 = vand.u32 2147483647, %v1393
  %vm1404 = vcmp.eq.f32.partialorder %v1403, 8.507059e+37
  %v1405 = vand.u32 %v1393, 2147483648
  %v1406 = vor.u32 1.1754944e-38, %v1405
  %v1407 = vsel %vm1404, %v1406, %v1402
  %v1408 = vmul.f32 1.0, %v1407
  %v1409 = vxor.u32 %v1387, 2147483648
  %v1410 = vmul.f32 %v1409, 1.442695
  %v1411 = vpow.pop %v1410
  %v1412 = vadd.f32 %v1411, 1.0
  %v1413 = vrcp.pop %v1412
  %v1414 = vmul.f32 %v1412, %v1413
  %v1415 = vsub.f32 1.0, %v1414
  %v1416 = vmul.f32 %v1413, %v1415
  %v1417 = vadd.f32 %v1413, %v1416
  %vm1418 = vweird.f32 %v1412
  %vm1419 = vweird.f32 %v1413
  %vm1420 = vmor %vm1418, %vm1419
  %v1421 = vsel %vm1420, %v1413, %v1417
  %v1422 = vand.u32 2147483647, %v1412
  %vm1423 = vcmp.eq.f32.partialorder %v1422, 8.507059e+37
  %v1424 = vand.u32 %v1412, 2147483648
  %v1425 = vor.u32 1.1754944e-38, %v1424
  %v1426 = vsel %vm1423, %v1425, %v1421
  %v1427 = vmul.f32 1.0, %v1426
  %v1428 = vtanh.pop %v1388
  %v1429 = vxor.u32 %v1389, 2147483648
  %v1430 = vmul.f32 %v1429, 1.442695
  %v1431 = vpow.pop %v1430
  %v1432 = vadd.f32 %v1431, 1.0
  %v1433 = vrcp.pop %v1432
  %v1434 = vmul.f32 %v1432, %v1433
  %v1435 = vsub.f32 1.0, %v1434
  %v1436 = vmul.f32 %v1433, %v1435
  %v1437 = vadd.f32 %v1433, %v1436
  %vm1438 = vweird.f32 %v1432
  %vm1439 = vweird.f32 %v1433
  %vm1440 = vmor %vm1438, %vm1439
  %v1441 = vsel %vm1440, %v1433, %v1437
  %v1442 = vand.u32 2147483647, %v1432
  %vm1443 = vcmp.eq.f32.partialorder %v1442, 8.507059e+37
  %v1444 = vand.u32 %v1432, 2147483648
  %v1445 = vor.u32 1.1754944e-38, %v1444
  %v1446 = vsel %vm1443, %v1445, %v1441
  %v1447 = vmul.f32 1.0, %v1446
  %v1448 = vmul.f32 %v1427, %v1298
  %v1449 = vmul.f32 %v1408, %v1428
  %v1450 = vadd.f32 %v1448, %v1449
  %v1451 = vtanh.pop %v1450
  %v1452 = vmul.f32 %v1447, %v1451
  %1453 = vst [vmem:[%s4 + $0x20] sm:$0xff] %v1452
  %v1454 = vld [vmem:[#allocation5 + $0xa0] sm:$0xff]
  %v1455 = vld [vmem:[#allocation5 + $0xa8] sm:$0xff]
  %v1456 = vld [vmem:[#allocation5 + $0xb0] sm:$0xff]
  %v1457 = vld [vmem:[#allocation5 + $0xb8] sm:$0xff]
  %1458 = vmatpush.msra.mxu0 %v688
  %1459 = vmatpush.msra.mxu0 %v684
  %1460 = vmatpush.msra.mxu0 %v680
  %1461 = vmatpush.msra.mxu0 %v676
  %1462 = vmatpush.msra.mxu0 %v672
  %1463 = vmatpush.msra.mxu0 %v668
  %1464 = vmatpush.msra.mxu0 %v664
  %1465 = vmatpush.msra.mxu0 %v660
  %1466 = vmatpush.msra.mxu0 %v656
  %1467 = vmatpush.msra.mxu0 %v652
  %1468 = vmatpush.msra.mxu0 %v648
  %1469 = vmatpush.msra.mxu0 %v644
  %1470 = vmatpush.msra.mxu0 %v640
  %1471 = vmatpush.msra.mxu0 %v636
  %1472 = vmatpush.msra.mxu0 %v632
  %1473 = vmatpush.msra.mxu0 %v628
  %1474 = vmatmul.f32.gmra.mxu0 %v1452
  %v1475 = vpop.f32.mrf.mxu0
  %v1476 = vadd.f32 0.0, %v1475
  %1477 = vdwg.mxu0
  %1478 = vmatpush.msra.mxu0 %v689
  %1479 = vmatpush.msra.mxu0 %v685
  %1480 = vmatpush.msra.mxu0 %v681
  %1481 = vmatpush.msra.mxu0 %v677
  %1482 = vmatpush.msra.mxu0 %v673
  %1483 = vmatpush.msra.mxu0 %v669
  %1484 = vmatpush.msra.mxu0 %v665
  %1485 = vmatpush.msra.mxu0 %v661
  %1486 = vmatpush.msra.mxu0 %v657
  %1487 = vmatpush.msra.mxu0 %v653
  %1488 = vmatpush.msra.mxu0 %v649
  %1489 = vmatpush.msra.mxu0 %v645
  %1490 = vmatpush.msra.mxu0 %v641
  %1491 = vmatpush.msra.mxu0 %v637
  %1492 = vmatpush.msra.mxu0 %v633
  %1493 = vmatpush.msra.mxu0 %v629
  %1494 = vmatmul.f32.gmra.mxu0 %v1452
  %v1495 = vpop.f32.mrf.mxu0
  %v1496 = vadd.f32 0.0, %v1495
  %1497 = vdwg.mxu0
  %1498 = vmatpush.msra.mxu0 %v690
  %1499 = vmatpush.msra.mxu0 %v686
  %1500 = vmatpush.msra.mxu0 %v682
  %1501 = vmatpush.msra.mxu0 %v678
  %1502 = vmatpush.msra.mxu0 %v674
  %1503 = vmatpush.msra.mxu0 %v670
  %1504 = vmatpush.msra.mxu0 %v666
  %1505 = vmatpush.msra.mxu0 %v662
  %1506 = vmatpush.msra.mxu0 %v658
  %1507 = vmatpush.msra.mxu0 %v654
  %1508 = vmatpush.msra.mxu0 %v650
  %1509 = vmatpush.msra.mxu0 %v646
  %1510 = vmatpush.msra.mxu0 %v642
  %1511 = vmatpush.msra.mxu0 %v638
  %1512 = vmatpush.msra.mxu0 %v634
  %1513 = vmatpush.msra.mxu0 %v630
  %1514 = vmatmul.f32.gmra.mxu0 %v1452
  %v1515 = vpop.f32.mrf.mxu0
  %v1516 = vadd.f32 0.0, %v1515
  %1517 = vdwg.mxu0
  %1518 = vmatpush.msra.mxu0 %v691
  %1519 = vmatpush.msra.mxu0 %v687
  %1520 = vmatpush.msra.mxu0 %v683
  %1521 = vmatpush.msra.mxu0 %v679
  %1522 = vmatpush.msra.mxu0 %v675
  %1523 = vmatpush.msra.mxu0 %v671
  %1524 = vmatpush.msra.mxu0 %v667
  %1525 = vmatpush.msra.mxu0 %v663
  %1526 = vmatpush.msra.mxu0 %v659
  %1527 = vmatpush.msra.mxu0 %v655
  %1528 = vmatpush.msra.mxu0 %v651
  %1529 = vmatpush.msra.mxu0 %v647
  %1530 = vmatpush.msra.mxu0 %v643
  %1531 = vmatpush.msra.mxu0 %v639
  %1532 = vmatpush.msra.mxu0 %v635
  %1533 = vmatpush.msra.mxu0 %v631
  %1534 = vmatmul.f32.gmra.mxu0 %v1452
  %v1535 = vpop.f32.mrf.mxu0
  %v1536 = vadd.f32 0.0, %v1535
  %1537 = vdwg.mxu0
  %v1538 = vadd.f32 %v1454, %v1476
  %v1539 = vadd.f32 %v1455, %v1496
  %v1540 = vadd.f32 %v1456, %v1516
  %v1541 = vadd.f32 %v1457, %v1536
  %v1542 = vxor.u32 %v1538, 2147483648
  %v1543 = vmul.f32 %v1542, 1.442695
  %v1544 = vpow.pop %v1543
  %v1545 = vadd.f32 %v1544, 1.0
  %v1546 = vrcp.pop %v1545
  %v1547 = vmul.f32 %v1545, %v1546
  %v1548 = vsub.f32 1.0, %v1547
  %v1549 = vmul.f32 %v1546, %v1548
  %v1550 = vadd.f32 %v1546, %v1549
  %vm1551 = vweird.f32 %v1545
  %vm1552 = vweird.f32 %v1546
  %vm1553 = vmor %vm1551, %vm1552
  %v1554 = vsel %vm1553, %v1546, %v1550
  %v1555 = vand.u32 2147483647, %v1545
  %vm1556 = vcmp.eq.f32.partialorder %v1555, 8.507059e+37
  %v1557 = vand.u32 %v1545, 2147483648
  %v1558 = vor.u32 1.1754944e-38, %v1557
  %v1559 = vsel %vm1556, %v1558, %v1554
  %v1560 = vmul.f32 1.0, %v1559
  %v1561 = vxor.u32 %v1539, 2147483648
  %v1562 = vmul.f32 %v1561, 1.442695
  %v1563 = vpow.pop %v1562
  %v1564 = vadd.f32 %v1563, 1.0
  %v1565 = vrcp.pop %v1564
  %v1566 = vmul.f32 %v1564, %v1565
  %v1567 = vsub.f32 1.0, %v1566
  %v1568 = vmul.f32 %v1565, %v1567
  %v1569 = vadd.f32 %v1565, %v1568
  %vm1570 = vweird.f32 %v1564
  %vm1571 = vweird.f32 %v1565
  %vm1572 = vmor %vm1570, %vm1571
  %v1573 = vsel %vm1572, %v1565, %v1569
  %v1574 = vand.u32 2147483647, %v1564
  %vm1575 = vcmp.eq.f32.partialorder %v1574, 8.507059e+37
  %v1576 = vand.u32 %v1564, 2147483648
  %v1577 = vor.u32 1.1754944e-38, %v1576
  %v1578 = vsel %vm1575, %v1577, %v1573
  %v1579 = vmul.f32 1.0, %v1578
  %v1580 = vtanh.pop %v1540
  %v1581 = vxor.u32 %v1541, 2147483648
  %v1582 = vmul.f32 %v1581, 1.442695
  %v1583 = vpow.pop %v1582
  %v1584 = vadd.f32 %v1583, 1.0
  %v1585 = vrcp.pop %v1584
  %v1586 = vmul.f32 %v1584, %v1585
  %v1587 = vsub.f32 1.0, %v1586
  %v1588 = vmul.f32 %v1585, %v1587
  %v1589 = vadd.f32 %v1585, %v1588
  %vm1590 = vweird.f32 %v1584
  %vm1591 = vweird.f32 %v1585
  %vm1592 = vmor %vm1590, %vm1591
  %v1593 = vsel %vm1592, %v1585, %v1589
  %v1594 = vand.u32 2147483647, %v1584
  %vm1595 = vcmp.eq.f32.partialorder %v1594, 8.507059e+37
  %v1596 = vand.u32 %v1584, 2147483648
  %v1597 = vor.u32 1.1754944e-38, %v1596
  %v1598 = vsel %vm1595, %v1597, %v1593
  %v1599 = vmul.f32 1.0, %v1598
  %v1600 = vmul.f32 %v1579, %v1450
  %v1601 = vmul.f32 %v1560, %v1580
  %v1602 = vadd.f32 %v1600, %v1601
  %v1603 = vtanh.pop %v1602
  %v1604 = vmul.f32 %v1599, %v1603
  %1605 = vst [vmem:[%s4 + $0x28] sm:$0xff] %v1604
  %v1606 = vld [vmem:[#allocation5 + $0xc0] sm:$0xff]
  %v1607 = vld [vmem:[#allocation5 + $0xc8] sm:$0xff]
  %v1608 = vld [vmem:[#allocation5 + $0xd0] sm:$0xff]
  %v1609 = vld [vmem:[#allocation5 + $0xd8] sm:$0xff]
  %1610 = vmatpush.msra.mxu0 %v688
  %1611 = vmatpush.msra.mxu0 %v684
  %1612 = vmatpush.msra.mxu0 %v680
  %1613 = vmatpush.msra.mxu0 %v676
  %1614 = vmatpush.msra.mxu0 %v672
  %1615 = vmatpush.msra.mxu0 %v668
  %1616 = vmatpush.msra.mxu0 %v664
  %1617 = vmatpush.msra.mxu0 %v660
  %1618 = vmatpush.msra.mxu0 %v656
  %1619 = vmatpush.msra.mxu0 %v652
  %1620 = vmatpush.msra.mxu0 %v648
  %1621 = vmatpush.msra.mxu0 %v644
  %1622 = vmatpush.msra.mxu0 %v640
  %1623 = vmatpush.msra.mxu0 %v636
  %1624 = vmatpush.msra.mxu0 %v632
  %1625 = vmatpush.msra.mxu0 %v628
  %1626 = vmatmul.f32.gmra.mxu0 %v1604
  %v1627 = vpop.f32.mrf.mxu0
  %v1628 = vadd.f32 0.0, %v1627
  %1629 = vdwg.mxu0
  %1630 = vmatpush.msra.mxu0 %v689
  %1631 = vmatpush.msra.mxu0 %v685
  %1632 = vmatpush.msra.mxu0 %v681
  %1633 = vmatpush.msra.mxu0 %v677
  %1634 = vmatpush.msra.mxu0 %v673
  %1635 = vmatpush.msra.mxu0 %v669
  %1636 = vmatpush.msra.mxu0 %v665
  %1637 = vmatpush.msra.mxu0 %v661
  %1638 = vmatpush.msra.mxu0 %v657
  %1639 = vmatpush.msra.mxu0 %v653
  %1640 = vmatpush.msra.mxu0 %v649
  %1641 = vmatpush.msra.mxu0 %v645
  %1642 = vmatpush.msra.mxu0 %v641
  %1643 = vmatpush.msra.mxu0 %v637
  %1644 = vmatpush.msra.mxu0 %v633
  %1645 = vmatpush.msra.mxu0 %v629
  %1646 = vmatmul.f32.gmra.mxu0 %v1604
  %v1647 = vpop.f32.mrf.mxu0
  %v1648 = vadd.f32 0.0, %v1647
  %1649 = vdwg.mxu0
  %1650 = vmatpush.msra.mxu0 %v690
  %1651 = vmatpush.msra.mxu0 %v686
  %1652 = vmatpush.msra.mxu0 %v682
  %1653 = vmatpush.msra.mxu0 %v678
  %1654 = vmatpush.msra.mxu0 %v674
  %1655 = vmatpush.msra.mxu0 %v670
  %1656 = vmatpush.msra.mxu0 %v666
  %1657 = vmatpush.msra.mxu0 %v662
  %1658 = vmatpush.msra.mxu0 %v658
  %1659 = vmatpush.msra.mxu0 %v654
  %1660 = vmatpush.msra.mxu0 %v650
  %1661 = vmatpush.msra.mxu0 %v646
  %1662 = vmatpush.msra.mxu0 %v642
  %1663 = vmatpush.msra.mxu0 %v638
  %1664 = vmatpush.msra.mxu0 %v634
  %1665 = vmatpush.msra.mxu0 %v630
  %1666 = vmatmul.f32.gmra.mxu0 %v1604
  %v1667 = vpop.f32.mrf.mxu0
  %v1668 = vadd.f32 0.0, %v1667
  %1669 = vdwg.mxu0
  %1670 = vmatpush.msra.mxu0 %v691
  %1671 = vmatpush.msra.mxu0 %v687
  %1672 = vmatpush.msra.mxu0 %v683
  %1673 = vmatpush.msra.mxu0 %v679
  %1674 = vmatpush.msra.mxu0 %v675
  %1675 = vmatpush.msra.mxu0 %v671
  %1676 = vmatpush.msra.mxu0 %v667
  %1677 = vmatpush.msra.mxu0 %v663
  %1678 = vmatpush.msra.mxu0 %v659
  %1679 = vmatpush.msra.mxu0 %v655
  %1680 = vmatpush.msra.mxu0 %v651
  %1681 = vmatpush.msra.mxu0 %v647
  %1682 = vmatpush.msra.mxu0 %v643
  %1683 = vmatpush.msra.mxu0 %v639
  %1684 = vmatpush.msra.mxu0 %v635
  %1685 = vmatpush.msra.mxu0 %v631
  %1686 = vmatmul.f32.gmra.mxu0 %v1604
  %v1687 = vpop.f32.mrf.mxu0
  %v1688 = vadd.f32 0.0, %v1687
  %1689 = vdwg.mxu0
  %v1690 = vadd.f32 %v1606, %v1628
  %v1691 = vadd.f32 %v1607, %v1648
  %v1692 = vadd.f32 %v1608, %v1668
  %v1693 = vadd.f32 %v1609, %v1688
  %v1694 = vxor.u32 %v1690, 2147483648
  %v1695 = vmul.f32 %v1694, 1.442695
  %v1696 = vpow.pop %v1695
  %v1697 = vadd.f32 %v1696, 1.0
  %v1698 = vrcp.pop %v1697
  %v1699 = vmul.f32 %v1697, %v1698
  %v1700 = vsub.f32 1.0, %v1699
  %v1701 = vmul.f32 %v1698, %v1700
  %v1702 = vadd.f32 %v1698, %v1701
  %vm1703 = vweird.f32 %v1697
  %vm1704 = vweird.f32 %v1698
  %vm1705 = vmor %vm1703, %vm1704
  %v1706 = vsel %vm1705, %v1698, %v1702
  %v1707 = vand.u32 2147483647, %v1697
  %vm1708 = vcmp.eq.f32.partialorder %v1707, 8.507059e+37
  %v1709 = vand.u32 %v1697, 2147483648
  %v1710 = vor.u32 1.1754944e-38, %v1709
  %v1711 = vsel %vm1708, %v1710, %v1706
  %v1712 = vmul.f32 1.0, %v1711
  %v1713 = vxor.u32 %v1691, 2147483648
  %v1714 = vmul.f32 %v1713, 1.442695
  %v1715 = vpow.pop %v1714
  %v1716 = vadd.f32 %v1715, 1.0
  %v1717 = vrcp.pop %v1716
  %v1718 = vmul.f32 %v1716, %v1717
  %v1719 = vsub.f32 1.0, %v1718
  %v1720 = vmul.f32 %v1717, %v1719
  %v1721 = vadd.f32 %v1717, %v1720
  %vm1722 = vweird.f32 %v1716
  %vm1723 = vweird.f32 %v1717
  %vm1724 = vmor %vm1722, %vm1723
  %v1725 = vsel %vm1724, %v1717, %v1721
  %v1726 = vand.u32 2147483647, %v1716
  %vm1727 = vcmp.eq.f32.partialorder %v1726, 8.507059e+37
  %v1728 = vand.u32 %v1716, 2147483648
  %v1729 = vor.u32 1.1754944e-38, %v1728
  %v1730 = vsel %vm1727, %v1729, %v1725
  %v1731 = vmul.f32 1.0, %v1730
  %v1732 = vtanh.pop %v1692
  %v1733 = vxor.u32 %v1693, 2147483648
  %v1734 = vmul.f32 %v1733, 1.442695
  %v1735 = vpow.pop %v1734
  %v1736 = vadd.f32 %v1735, 1.0
  %v1737 = vrcp.pop %v1736
  %v1738 = vmul.f32 %v1736, %v1737
  %v1739 = vsub.f32 1.0, %v1738
  %v1740 = vmul.f32 %v1737, %v1739
  %v1741 = vadd.f32 %v1737, %v1740
  %vm1742 = vweird.f32 %v1736
  %vm1743 = vweird.f32 %v1737
  %vm1744 = vmor %vm1742, %vm1743
  %v1745 = vsel %vm1744, %v1737, %v1741
  %v1746 = vand.u32 2147483647, %v1736
  %vm1747 = vcmp.eq.f32.partialorder %v1746, 8.507059e+37
  %v1748 = vand.u32 %v1736, 2147483648
  %v1749 = vor.u32 1.1754944e-38, %v1748
  %v1750 = vsel %vm1747, %v1749, %v1745
  %v1751 = vmul.f32 1.0, %v1750
  %v1752 = vmul.f32 %v1731, %v1602
  %v1753 = vmul.f32 %v1712, %v1732
  %v1754 = vadd.f32 %v1752, %v1753
  %v1755 = vtanh.pop %v1754
  %v1756 = vmul.f32 %v1751, %v1755
  %1757 = vst [vmem:[%s4 + $0x30] sm:$0xff] %v1756
  %v1758 = vld [vmem:[#allocation5 + $0xe0] sm:$0xff]
  %v1759 = vld [vmem:[#allocation5 + $0xe8] sm:$0xff]
  %v1760 = vld [vmem:[#allocation5 + $0xf0] sm:$0xff]
  %v1761 = vld [vmem:[#allocation5 + $0xf8] sm:$0xff]
  %1762 = vmatpush.msra.mxu0 %v688
  %1763 = vmatpush.msra.mxu0 %v684
  %1764 = vmatpush.msra.mxu0 %v680
  %1765 = vmatpush.msra.mxu0 %v676
  %1766 = vmatpush.msra.mxu0 %v672
  %1767 = vmatpush.msra.mxu0 %v668
  %1768 = vmatpush.msra.mxu0 %v664
  %1769 = vmatpush.msra.mxu0 %v660
  %1770 = vmatpush.msra.mxu0 %v656
  %1771 = vmatpush.msra.mxu0 %v652
  %1772 = vmatpush.msra.mxu0 %v648
  %1773 = vmatpush.msra.mxu0 %v644
  %1774 = vmatpush.msra.mxu0 %v640
  %1775 = vmatpush.msra.mxu0 %v636
  %1776 = vmatpush.msra.mxu0 %v632
  %1777 = vmatpush.msra.mxu0 %v628
  %1778 = vmatmul.f32.gmra.mxu0 %v1756
  %v1779 = vpop.f32.mrf.mxu0
  %v1780 = vadd.f32 0.0, %v1779
  %1781 = vdwg.mxu0
  %1782 = vmatpush.msra.mxu0 %v689
  %1783 = vmatpush.msra.mxu0 %v685
  %1784 = vmatpush.msra.mxu0 %v681
  %1785 = vmatpush.msra.mxu0 %v677
  %1786 = vmatpush.msra.mxu0 %v673
  %1787 = vmatpush.msra.mxu0 %v669
  %1788 = vmatpush.msra.mxu0 %v665
  %1789 = vmatpush.msra.mxu0 %v661
  %1790 = vmatpush.msra.mxu0 %v657
  %1791 = vmatpush.msra.mxu0 %v653
  %1792 = vmatpush.msra.mxu0 %v649
  %1793 = vmatpush.msra.mxu0 %v645
  %1794 = vmatpush.msra.mxu0 %v641
  %1795 = vmatpush.msra.mxu0 %v637
  %1796 = vmatpush.msra.mxu0 %v633
  %1797 = vmatpush.msra.mxu0 %v629
  %1798 = vmatmul.f32.gmra.mxu0 %v1756
  %v1799 = vpop.f32.mrf.mxu0
  %v1800 = vadd.f32 0.0, %v1799
  %1801 = vdwg.mxu0
  %1802 = vmatpush.msra.mxu0 %v690
  %1803 = vmatpush.msra.mxu0 %v686
  %1804 = vmatpush.msra.mxu0 %v682
  %1805 = vmatpush.msra.mxu0 %v678
  %1806 = vmatpush.msra.mxu0 %v674
  %1807 = vmatpush.msra.mxu0 %v670
  %1808 = vmatpush.msra.mxu0 %v666
  %1809 = vmatpush.msra.mxu0 %v662
  %1810 = vmatpush.msra.mxu0 %v658
  %1811 = vmatpush.msra.mxu0 %v654
  %1812 = vmatpush.msra.mxu0 %v650
  %1813 = vmatpush.msra.mxu0 %v646
  %1814 = vmatpush.msra.mxu0 %v642
  %1815 = vmatpush.msra.mxu0 %v638
  %1816 = vmatpush.msra.mxu0 %v634
  %1817 = vmatpush.msra.mxu0 %v630
  %1818 = vmatmul.f32.gmra.mxu0 %v1756
  %v1819 = vpop.f32.mrf.mxu0
  %v1820 = vadd.f32 0.0, %v1819
  %1821 = vdwg.mxu0
  %1822 = vmatpush.msra.mxu0 %v691
  %1823 = vmatpush.msra.mxu0 %v687
  %1824 = vmatpush.msra.mxu0 %v683
  %1825 = vmatpush.msra.mxu0 %v679
  %1826 = vmatpush.msra.mxu0 %v675
  %1827 = vmatpush.msra.mxu0 %v671
  %1828 = vmatpush.msra.mxu0 %v667
  %1829 = vmatpush.msra.mxu0 %v663
  %1830 = vmatpush.msra.mxu0 %v659
  %1831 = vmatpush.msra.mxu0 %v655
  %1832 = vmatpush.msra.mxu0 %v651
  %1833 = vmatpush.msra.mxu0 %v647
  %1834 = vmatpush.msra.mxu0 %v643
  %1835 = vmatpush.msra.mxu0 %v639
  %1836 = vmatpush.msra.mxu0 %v635
  %1837 = vmatpush.msra.mxu0 %v631
  %1838 = vmatmul.f32.gmra.mxu0 %v1756
  %v1839 = vpop.f32.mrf.mxu0
  %v1840 = vadd.f32 0.0, %v1839
  %1841 = vdwg.mxu0
  %v1842 = vadd.f32 %v1758, %v1780
  %v1843 = vadd.f32 %v1759, %v1800
  %v1844 = vadd.f32 %v1760, %v1820
  %v1845 = vadd.f32 %v1761, %v1840
  %v1846 = vxor.u32 %v1842, 2147483648
  %v1847 = vmul.f32 %v1846, 1.442695
  %v1848 = vpow.pop %v1847
  %v1849 = vadd.f32 %v1848, 1.0
  %v1850 = vrcp.pop %v1849
  %v1851 = vmul.f32 %v1849, %v1850
  %v1852 = vsub.f32 1.0, %v1851
  %v1853 = vmul.f32 %v1850, %v1852
  %v1854 = vadd.f32 %v1850, %v1853
  %vm1855 = vweird.f32 %v1849
  %vm1856 = vweird.f32 %v1850
  %vm1857 = vmor %vm1855, %vm1856
  %v1858 = vsel %vm1857, %v1850, %v1854
  %v1859 = vand.u32 2147483647, %v1849
  %vm1860 = vcmp.eq.f32.partialorder %v1859, 8.507059e+37
  %v1861 = vand.u32 %v1849, 2147483648
  %v1862 = vor.u32 1.1754944e-38, %v1861
  %v1863 = vsel %vm1860, %v1862, %v1858
  %v1864 = vmul.f32 1.0, %v1863
  %v1865 = vxor.u32 %v1843, 2147483648
  %v1866 = vmul.f32 %v1865, 1.442695
  %v1867 = vpow.pop %v1866
  %v1868 = vadd.f32 %v1867, 1.0
  %v1869 = vrcp.pop %v1868
  %v1870 = vmul.f32 %v1868, %v1869
  %v1871 = vsub.f32 1.0, %v1870
  %v1872 = vmul.f32 %v1869, %v1871
  %v1873 = vadd.f32 %v1869, %v1872
  %vm1874 = vweird.f32 %v1868
  %vm1875 = vweird.f32 %v1869
  %vm1876 = vmor %vm1874, %vm1875
  %v1877 = vsel %vm1876, %v1869, %v1873
  %v1878 = vand.u32 2147483647, %v1868
  %vm1879 = vcmp.eq.f32.partialorder %v1878, 8.507059e+37
  %v1880 = vand.u32 %v1868, 2147483648
  %v1881 = vor.u32 1.1754944e-38, %v1880
  %v1882 = vsel %vm1879, %v1881, %v1877
  %v1883 = vmul.f32 1.0, %v1882
  %v1884 = vtanh.pop %v1844
  %v1885 = vxor.u32 %v1845, 2147483648
  %v1886 = vmul.f32 %v1885, 1.442695
  %v1887 = vpow.pop %v1886
  %v1888 = vadd.f32 %v1887, 1.0
  %v1889 = vrcp.pop %v1888
  %v1890 = vmul.f32 %v1888, %v1889
  %v1891 = vsub.f32 1.0, %v1890
  %v1892 = vmul.f32 %v1889, %v1891
  %v1893 = vadd.f32 %v1889, %v1892
  %vm1894 = vweird.f32 %v1888
  %vm1895 = vweird.f32 %v1889
  %vm1896 = vmor %vm1894, %vm1895
  %v1897 = vsel %vm1896, %v1889, %v1893
  %v1898 = vand.u32 2147483647, %v1888
  %vm1899 = vcmp.eq.f32.partialorder %v1898, 8.507059e+37
  %v1900 = vand.u32 %v1888, 2147483648
  %v1901 = vor.u32 1.1754944e-38, %v1900
  %v1902 = vsel %vm1899, %v1901, %v1897
  %v1903 = vmul.f32 1.0, %v1902
  %v1904 = vmul.f32 %v1883, %v1754
  %v1905 = vmul.f32 %v1864, %v1884
  %v1906 = vadd.f32 %v1904, %v1905
  %v1907 = vtanh.pop %v1906
  %v1908 = vmul.f32 %v1903, %v1907
  %1909 = vst [vmem:[%s4 + $0x38] sm:$0xff] %v1908
  %1910 = vst [vmem:[#allocation6] sm:$0xff] %v1908
  %1911 = vst [vmem:[#allocation7] sm:$0xff] %v1906
  // Predicated region
  $region81: #{lstm_bc_intp_forward.1} parent=0 // pred_check
    _
  $region82: #{lstm_bc_intp_forward.1} parent=0 // pred_check_branch
    %1913 = sbr.rel (0) target = $region84
  $region83: #{lstm_bc_intp_forward.1} parent=0 // pred_region
    _
  $region84: #{lstm_bc_intp_forward.1} parent=0 // pred_fallthru
    _
  // Predicated region
  $region85: #{lstm_bc_intp_forward.1} parent=0 // pred_check
    _
  $region86: #{lstm_bc_intp_forward.1} parent=0 // pred_check_branch
    %1915 = sbr.rel (0) target = $region88
  $region87: #{lstm_bc_intp_forward.1} parent=0 // pred_region
    _
  $region88: #{lstm_bc_intp_forward.1} parent=0 // pred_fallthru
    _

</llo_original>
